<compile_context>
chip_gen: v7x
topology: tpu7x:2x2x1
jax: 0.10.0
libtpu: 0.0.40
codegen_flags: <defaults>
</compile_context>

<pallas_src>
import jax
import jax.numpy as jnp
from jax.experimental import pallas as pl
from jax.experimental.pallas import tpu as pltpu

BN_EPS = 1e-5
_VPU_ADJ_MAX_N = 32        # below this, adj contraction runs as f32 VPU FMAs


def _round_up(x, m):
    return ((x + m - 1) // m) * m


def _tpu_vmem_capacity_bytes():
    try:
        return int(pltpu.get_tpu_info().vmem_capacity_bytes)
    except Exception:
        return 64 * 1024 * 1024      # conservative fallback (v7x per-TensorCore)


def _buffered_block_spec(block_shape, index_map, depth):
    """BlockSpec with pipeline_mode=pl.Buffered(depth); graceful fallback."""
    try:
        return pl.BlockSpec(block_shape, index_map,
                            pipeline_mode=pl.Buffered(depth))
    except Exception:
        return pl.BlockSpec(block_shape, index_map)


def _adj_contract(adj_op, support_f32, use_vpu):
    """out[b,n,o] = sum_m adj[b,n,m] * support[b,m,o].

    use_vpu: adj_op is f32; contraction is N broadcast FMAs on the VPU
             (avoids tiny MXU fill/drain latency, keeps v5e in f32).
    else:    adj_op is bf16 (cast in-kernel); batched MXU matmul, f32 accum.
    """
    if use_vpu:
        n = adj_op.shape[-1]
        out = adj_op[..., 0:1] * support_f32[..., 0:1, :]
        for m in range(1, n):
            out = out + adj_op[..., m:m + 1] * support_f32[..., m:m + 1, :]
        return out
    return jnp.einsum('bnm,bmo->bno', adj_op,
                      support_f32.astype(jnp.bfloat16),
                      preferred_element_type=jnp.float32)


# ---------------------------------------------------------------------------
# Fused (resident-adj) path: one gridless kernel, all three layers.
# ---------------------------------------------------------------------------
def _pack_params_fused(params, nhid, nclass):
    lanes = max(128, _round_up(2 * nhid, 128), _round_up(2 * nclass, 128))

    # f32 slab: w1 (2 rows) + 7 vector rows (b1, b2, b3, g1, be1, g2, be2).
    n_vrows = _round_up(2 + 7, 8)
    vslab = jnp.zeros((n_vrows, lanes), jnp.float32)
    w1 = jnp.concatenate([params['wg1'], params['ws1']], axis=-1)     # (2, 2*nhid)
    vslab = vslab.at[0:2, :2 * nhid].set(w1)
    vecs = [
        params['bg1'] + params['bs1'],
        params['bg2'] + params['bs2'],
        params['bg3'] + params['bs3'],
        params['gamma1'], params['beta1'],
        params['gamma2'], params['beta2'],
    ]
    for i, v in enumerate(vecs):
        vslab = vslab.at[2 + i, :v.shape[0]].set(v)

    # bf16 slab: w2 rows [0, nhid), w3 rows [nhid, 2*nhid).
    n_wrows = _round_up(2 * nhid, 16)
    wslab = jnp.zeros((n_wrows, lanes), jnp.float32)
    w2 = jnp.concatenate([params['wg2'], params['ws2']], axis=-1)
    w3 = jnp.concatenate([params['wg3'], params['ws3']], axis=-1)
    wslab = wslab.at[0:nhid, :2 * nhid].set(w2)
    wslab = wslab.at[nhid:2 * nhid, :2 * nclass].set(w3)
    wslab = wslab.astype(jnp.bfloat16)

    layout = dict(R_W1=0, R_B1=2, R_B2=3, R_B3=4, R_G1=5, R_BE1=6, R_G2=7,
                  R_BE2=8, R_W2=0, R_W3=nhid)
    return wslab, vslab, layout


def _fused_vmem_estimate(B, N, nhid, nclass):
    use_vpu = N <= _VPU_ADJ_MAX_N
    out_pad = max(128, _round_up(nclass, 128))
    lanes = max(128, _round_up(2 * nhid, 128), _round_up(2 * nclass, 128))
    adj_b = 4 * B * N * N + (0 if use_vpu else 2 * B * N * N)
    act_b = 4 * B * N * (2 + 6 * nhid + 2 * nclass + out_pad)
    slab_b = 4 * 16 * lanes + 2 * _round_up(2 * nhid, 16) * lanes
    return adj_b + act_b + slab_b + (2 << 20)


def _simple_cs_gcn_fused(node_input, adj, params, nhid, nclass, cap, est_bytes):
    B, N, _ = node_input.shape
    M = B * N
    use_vpu_adj = N <= _VPU_ADJ_MAX_N
    out_pad = max(128, _round_up(nclass, 128))
    wslab, vslab, L = _pack_params_fused(params, nhid, nclass)
    R_W1, R_B1, R_B2, R_B3 = L['R_W1'], L['R_B1'], L['R_B2'], L['R_B3']
    R_G1, R_BE1, R_G2, R_BE2 = L['R_G1'], L['R_BE1'], L['R_G2'], L['R_BE2']
    R_W2, R_W3 = L['R_W2'], L['R_W3']

    def kernel(x_ref, adj_ref, w_ref, v_ref, out_ref):
        x = x_ref[...]                               # (B, N, 2)  f32
        adjf = adj_ref[...]                          # (B, N, N)  f32
        # bf16 cast (when the MXU path is used) happens here, in VMEM.
        adj_op = adjf if use_vpu_adj else adjf.astype(jnp.bfloat16)

        def adj_mix(y, r_bias, nout):
            # y = x @ [Wg | Ws]  ->  adj @ y[..,:nout] + y[..,nout:] + (bg+bs)
            support = y[..., :nout]
            sl = y[..., nout:2 * nout]
            bias = v_ref[r_bias:r_bias + 1, :nout]                 # (1, nout)
            return _adj_contract(adj_op, support, use_vpu_adj) + sl + bias

        def bn_relu(h, r_gamma, r_beta):
            # Exact two-pass batch statistics over the (B, N) axes.
            gamma = v_ref[r_gamma:r_gamma + 1, :nhid]              # (1, nhid)
            beta = v_ref[r_beta:r_beta + 1, :nhid]
            mean = jnp.mean(h, axis=(0, 1), keepdims=True)
            var = jnp.mean(jnp.square(h - mean), axis=(0, 1), keepdims=True)
            scale = gamma * jax.lax.rsqrt(var + BN_EPS)
            shift = beta - mean * scale
            return jnp.maximum(h * scale + shift, 0.0)

        # ---- Layer 1: K=2 projection as two VPU broadcast FMAs (f32) ----
        y1 = (x[..., 0:1] * v_ref[R_W1:R_W1 + 1, :2 * nhid]
              + x[..., 1:2] * v_ref[R_W1 + 1:R_W1 + 2, :2 * nhid])  # (B,N,2*nhid)
        h = bn_relu(adj_mix(y1, R_B1, nhid), R_G1, R_BE1)
        # TODO(synk): training-mode F.dropout (Bernoulli mask) omitted; this
        # matches eval-mode (deterministic) semantics.

        # ---- Layer 2: fused [Wg|Ws] matmul, bf16 weights / f32 accumulate ----
        w2 = w_ref[R_W2:R_W2 + nhid, :2 * nhid]                      # bf16
        y2 = jnp.dot(h.reshape(M, nhid).astype(jnp.bfloat16), w2,
                     preferred_element_type=jnp.float32).reshape(B, N, 2 * nhid)
        h = bn_relu(adj_mix(y2, R_B2, nhid), R_G2, R_BE2)

        # ---- Layer 3 ----
        w3 = w_ref[R_W3:R_W3 + nhid, :2 * nclass]                    # bf16
        y3 = jnp.dot(h.reshape(M, nhid).astype(jnp.bfloat16), w3,
                     preferred_element_type=jnp.float32).reshape(B, N, 2 * nclass)
        raw = adj_mix(y3, R_B3, nclass)

        # Lane-dense raw output [raw | zero-pad]; sigmoid lives in the wrapper.
        pad = jnp.zeros((B, N, out_pad - nclass), jnp.float32)
        out_ref[...] = jnp.concatenate([raw, pad], axis=-1)

    vmem_limit = int(min(0.85 * cap, max(3 * est_bytes, 64 * 1024 * 1024)))
    flops = (2 * B * N * N * (2 * nhid + nclass)
             + 2 * M * (2 * 2 * nhid + nhid * 2 * nhid + nhid * 2 * nclass))
    bytes_acc = (4 * (M * 2 + B * N * N + M * out_pad)
                 + 2 * wslab.size + 4 * vslab.size)

    vmem = pl.BlockSpec(memory_space=pltpu.MemorySpace.VMEM)
    return pl.pallas_call(
        kernel,
        out_shape=jax.ShapeDtypeStruct((B, N, out_pad), jnp.float32),
        in_specs=[vmem, vmem, vmem, vmem],
        out_specs=vmem,
        compiler_params=pltpu.CompilerParams(vmem_limit_bytes=vmem_limit),
        cost_estimate=pl.CostEstimate(flops=int(flops), transcendentals=0,
                                      bytes_accessed=int(bytes_acc)),
    )(node_input, adj, wslab, vslab)


# ---------------------------------------------------------------------------
# Tiled path: grid over B ("parallel"), one pallas_call per layer, two-pass BN
# via per-tile partial sums combined in the wrapper.
# ---------------------------------------------------------------------------
def _bn_scale_shift(psum, psumsq, gamma, beta, count):
    s = jnp.sum(psum, axis=(0, 1))               # (nhid,)
    s2 = jnp.sum(psumsq, axis=(0, 1))
    mean = s / count
    # Cross-tile combinable form (E[x^2]-E[x]^2), clamped at zero.
    var = jnp.maximum(s2 / count - mean * mean, 0.0)
    scale = gamma * jax.lax.rsqrt(var + BN_EPS)
    shift = beta - mean * scale
    return jnp.stack([scale, shift], axis=0)     # (2, nhid) f32


def _simple_cs_gcn_tiled(node_input, adj, params, nhid, nclass, cap):
    B, N, _ = node_input.shape
    use_vpu_adj = N <= _VPU_ADJ_MAX_N
    out_pad = max(128, _round_up(nclass, 128))
    count = float(B * N)

    w1 = jnp.concatenate([params['wg1'], params['ws1']], axis=-1)          # f32
    w2 = jnp.concatenate([params['wg2'], params['ws2']], axis=-1).astype(jnp.bfloat16)
    w3 = jnp.concatenate([params['wg3'], params['ws3']], axis=-1).astype(jnp.bfloat16)
    b1 = (params['bg1'] + params['bs1']).reshape(1, nhid)
    b2 = (params['bg2'] + params['bs2']).reshape(1, nhid)
    b3 = (params['bg3'] + params['bs3']).reshape(1, nclass)

    adj_blk_bytes = 4 * N * N + (0 if use_vpu_adj else 2 * N * N)
    per_step = 3 * adj_blk_bytes + 8 * N * (6 * nhid + out_pad) + (4 << 20)
    vmem_limit = int(min(0.85 * cap, max(4 * per_step, 32 * 1024 * 1024)))
    cparams = pltpu.CompilerParams(dimension_semantics=("parallel",),
                                   vmem_limit_bytes=vmem_limit)

    adj_spec = _buffered_block_spec((1, N, N), lambda b: (b, 0, 0), 2)

    def row_spec(nout):
        return pl.BlockSpec((1, N, nout), lambda b: (b, 0, 0))

    stat_spec = pl.BlockSpec((1, 1, nhid), lambda b: (b, 0, 0))

    def full2d(arr):
        return pl.BlockSpec(arr.shape, lambda b: (0, 0))

    def cost(fin, nout, out_lanes):
        flops = B * (2 * N * fin * 2 * nout + 2 * N * N * nout)
        byts = 4 * B * N * N + 4 * B * N * (fin + out_lanes) + 4 * fin * 2 * nout
        return pl.CostEstimate(flops=int(flops), transcendentals=0,
                               bytes_accessed=int(byts))

    # ---- Layer 1: per-b tile, emits pre-BN h1 + per-tile BN partial sums ----
    def layer1_kernel(x_ref, adj_ref, w_ref, bias_ref, h_ref, s_ref, s2_ref):
        x = x_ref[...]                                     # (1, N, 2)
        adjf = adj_ref[...]
        adj_op = adjf if use_vpu_adj else adjf.astype(jnp.bfloat16)
        y = x[..., 0:1] * w_ref[0:1, :] + x[..., 1:2] * w_ref[1:2, :]
        h = (_adj_contract(adj_op, y[..., :nhid], use_vpu_adj)
             + y[..., nhid:] + bias_ref[...])
        h_ref[...] = h
        s_ref[...] = jnp.sum(h, axis=1, keepdims=True)
        s2_ref[...] = jnp.sum(h * h, axis=1, keepdims=True)

    h1, s1, q1 = pl.pallas_call(
        layer1_kernel,
        out_shape=(jax.ShapeDtypeStruct((B, N, nhid), jnp.float32),
                   jax.ShapeDtypeStruct((B, 1, nhid), jnp.float32),
                   jax.ShapeDtypeStruct((B, 1, nhid), jnp.float32)),
        grid=(B,),
        in_specs=[row_spec(2), adj_spec, full2d(w1), full2d(b1)],
        out_specs=(row_spec(nhid), stat_spec, stat_spec),
        compiler_params=cparams,
        cost_estimate=cost(2, nhid, nhid),
    )(node_input, adj, w1, b1)

    ss1 = _bn_scale_shift(s1, q1, params['gamma1'], params['beta1'], count)

    # ---- Layers 2/3: relu(BN(h_in)) -> [Wg|Ws] matmul -> adj mix ----
    def make_kernel(fin, nout, emit_stats):
        def kernel(h_ref, adj_ref, w_ref, bias_ref, ss_ref, out_ref, *stat_refs):
            adjf = adj_ref[...]
            adj_op = adjf if use_vpu_adj else adjf.astype(jnp.bfloat16)
            hin = jnp.maximum(h_ref[...] * ss_ref[0:1, :] + ss_ref[1:2, :], 0.0)
            # TODO(synk): training-mode dropout omitted (eval semantics).
            y = jnp.dot(hin.reshape(N, fin).astype(jnp.bfloat16), w_ref[...],
                        preferred_element_type=jnp.float32).reshape(1, N, 2 * nout)
            h = (_adj_contract(adj_op, y[..., :nout], use_vpu_adj)
                 + y[..., nout:] + bias_ref[...])
            if emit_stats:
                out_ref[...] = h
                stat_refs[0][...] = jnp.sum(h, axis=1, keepdims=True)
                stat_refs[1][...] = jnp.sum(h * h, axis=1, keepdims=True)
            else:
                pad = jnp.zeros((1, N, out_pad - nout), jnp.float32)
                out_ref[...] = jnp.concatenate([h, pad], axis=-1)
        return kernel

    h2, s2, q2 = pl.pallas_call(
        make_kernel(nhid, nhid, True),
        out_shape=(jax.ShapeDtypeStruct((B, N, nhid), jnp.float32),
                   jax.ShapeDtypeStruct((B, 1, nhid), jnp.float32),
                   jax.ShapeDtypeStruct((B, 1, nhid), jnp.float32)),
        grid=(B,),
        in_specs=[row_spec(nhid), adj_spec, full2d(w2), full2d(b2), full2d(ss1)],
        out_specs=(row_spec(nhid), stat_spec, stat_spec),
        compiler_params=cparams,
        cost_estimate=cost(nhid, nhid, nhid),
    )(h1, adj, w2, b2, ss1)

    ss2 = _bn_scale_shift(s2, q2, params['gamma2'], params['beta2'], count)

    raw_padded = pl.pallas_call(
        make_kernel(nhid, nclass, False),
        out_shape=jax.ShapeDtypeStruct((B, N, out_pad), jnp.float32),
        grid=(B,),
        in_specs=[row_spec(nhid), adj_spec, full2d(w3), full2d(b3), full2d(ss2)],
        out_specs=pl.BlockSpec((1, N, out_pad), lambda b: (b, 0, 0)),
        compiler_params=cparams,
        cost_estimate=cost(nhid, nclass, out_pad),
    )(h2, adj, w3, b3, ss2)
    return raw_padded


# ---------------------------------------------------------------------------
# Public wrapper with chip-aware dispatch.
# ---------------------------------------------------------------------------
def simple_cs_gcn(node_input, adj, params, nhid, nclass, force_tiled=False):
    """SimpleCS_GCN forward (node_input + adj path). Returns (sigmoid(h), h)."""
    B, N, nfeat_s = node_input.shape
    assert nfeat_s == 2, "structure_encoder1 / self_SE1 expect 2 input features"
    assert adj.shape == (B, N, N)

    cap = _tpu_vmem_capacity_bytes()
    est = _fused_vmem_estimate(B, N, nhid, nclass)
    use_fused = (not force_tiled) and (est <= 0.55 * cap)
    if use_fused:
        raw_padded = _simple_cs_gcn_fused(node_input, adj, params, nhid, nclass,
                                          cap, est)
    else:
        raw_padded = _simple_cs_gcn_tiled(node_input, adj, params, nhid, nclass,
                                          cap)
    raw = raw_padded[..., :nclass]
    return jax.nn.sigmoid(raw), raw


# ---------------------------------------------------------------------------
# Pure-JAX f32 reference (for correctness checks).
# ---------------------------------------------------------------------------
def reference_forward(x, adj, params):
    def layer(h, wg, bg, ws, bs):
        support = jnp.einsum('bnf,fo->bno', h, wg)
        gc = jnp.einsum('bnm,bmo->bno', adj, support) + bg
        sl = jnp.einsum('bnf,fo->bno', h, ws) + bs
        return gc + sl

    def bn(h, gamma, beta):
        mean = jnp.mean(h, axis=(0, 1), keepdims=True)
        var = jnp.mean((h - mean) ** 2, axis=(0, 1), keepdims=True)
        return (h - mean) * jax.lax.rsqrt(var + BN_EPS) * gamma + beta

    h = jax.nn.relu(bn(layer(x, params['wg1'], params['bg1'],
                             params['ws1'], params['bs1']),
                       params['gamma1'], params['beta1']))
    h = jax.nn.relu(bn(layer(h, params['wg2'], params['bg2'],
                             params['ws2'], params['bs2']),
                       params['gamma2'], params['beta2']))
    h = layer(h, params['wg3'], params['bg3'], params['ws3'], params['bs3'])
    return jax.nn.sigmoid(h), h


def init_params(key, nhid, nclass):
    ks = jax.random.split(key, 12)

    def w(k, fin, fout):
        return (jax.random.uniform(k, (fin, fout), jnp.float32, -1.0, 1.0)
                / jnp.sqrt(jnp.float32(fin)))

    def b(k, width):
        return 0.1 * jax.random.normal(k, (width,), jnp.float32)

    return {
        'wg1': w(ks[0], 2, nhid),      'bg1': b(ks[1], nhid),
        'ws1': w(ks[2], 2, nhid),      'bs1': b(ks[3], nhid),
        'gamma1': jnp.ones((nhid,), jnp.float32),
        'beta1': jnp.zeros((nhid,), jnp.float32),
        'wg2': w(ks[4], nhid, nhid),   'bg2': b(ks[5], nhid),
        'ws2': w(ks[6], nhid, nhid),   'bs2': b(ks[7], nhid),
        'gamma2': jnp.ones((nhid,), jnp.float32),
        'beta2': jnp.zeros((nhid,), jnp.float32),
        'wg3': w(ks[8], nhid, nclass),  'bg3': b(ks[9], nclass),
        'ws3': w(ks[10], nhid, nclass), 'bs3': b(ks[11], nclass),
    }


if __name__ == "__main__":
    key = jax.random.PRNGKey(0)
    k_data, k_adj, k_params = jax.random.split(key, 3)

    B, N = 2, 16          # batch of graphs, nodes per graph
    nhid, nclass = 32, 8  # hidden width, output classes
    # forward only consumes node_input (structural features, width 2) and adj;
    # att_input / Fadj / feat are unused on this code path.
    node_input = jax.random.normal(k_data, (B, N, 2), jnp.float32)
    adj_raw = jax.random.uniform(k_adj, (B, N, N), jnp.float32)
    adj = adj_raw / jnp.sum(adj_raw, axis=-1, keepdims=True)  # row-normalized

    params = init_params(k_params, nhid, nclass)
    sig_ref, raw_ref = reference_forward(node_input, adj, params)

    # Exercise both the fused (resident-adj) path and the gridded tiled path.
    for force_tiled in (False, True):
        sig_out, raw_out = simple_cs_gcn(node_input, adj, params, nhid, nclass,
                                         force_tiled=force_tiled)
        jax.block_until_ready((sig_out, raw_out))

        assert sig_out.shape == (B, N, nclass) and raw_out.shape == (B, N, nclass)
        assert bool(jnp.all(jnp.isfinite(raw_out)))
        assert bool(jnp.all((sig_out >= 0.0) & (sig_out <= 1.0)))

        err_sig = float(jnp.max(jnp.abs(sig_out - sig_ref)))
        err_raw = float(jnp.max(jnp.abs(raw_out - raw_ref)))
        assert err_sig < 5e-2 and err_raw < 2e-1, (force_tiled, err_sig, err_raw)

    print("KERNEL_OK")
</pallas_src>

<mosaic_0001>
module attributes {stable_mosaic.version = 11 : i64} {
  func.func @kernel(%arg0: memref<2x16x2xf32, #tpu.memory_space<vmem>>, %arg1: memref<2x16x16xf32, #tpu.memory_space<vmem>>, %arg2: memref<64x128xbf16, #tpu.memory_space<vmem>>, %arg3: memref<16x128xf32, #tpu.memory_space<vmem>>, %arg4: memref<2x16x128xf32, #tpu.memory_space<vmem>>) attributes {dimension_semantics = [], scalar_prefetch = 0 : i64, scratch_operands = 0 : i64, tpu.core_type = #tpu.core_type<tc>} {
    %c0 = arith.constant 0 : index
    %c0_0 = arith.constant 0 : index
    %c0_1 = arith.constant 0 : index
    %0 = vector.load %arg0[%c0, %c0_0, %c0_1] : memref<2x16x2xf32, #tpu.memory_space<vmem>>, vector<2x16x2xf32>
    %c0_2 = arith.constant 0 : index
    %c0_3 = arith.constant 0 : index
    %c0_4 = arith.constant 0 : index
    %1 = vector.load %arg1[%c0_2, %c0_3, %c0_4] : memref<2x16x16xf32, #tpu.memory_space<vmem>>, vector<2x16x16xf32>
    %2 = vector.extract_strided_slice %0 {offsets = [0, 0, 0], sizes = [2, 16, 1], strides = [1, 1, 1]} : vector<2x16x2xf32> to vector<2x16x1xf32>
    %c0_5 = arith.constant 0 : index
    %c0_6 = arith.constant 0 : index
    %3 = vector.load %arg3[%c0_5, %c0_6] : memref<16x128xf32, #tpu.memory_space<vmem>>, vector<1x64xf32>
    %4 = vector.shape_cast %3 : vector<1x64xf32> to vector<1x1x64xf32>
    %5 = vector.broadcast %2 : vector<2x16x1xf32> to vector<2x16x64xf32>
    %6 = vector.broadcast %4 : vector<1x1x64xf32> to vector<2x16x64xf32>
    %7 = arith.mulf %5, %6 : vector<2x16x64xf32>
    %8 = vector.extract_strided_slice %0 {offsets = [0, 0, 1], sizes = [2, 16, 1], strides = [1, 1, 1]} : vector<2x16x2xf32> to vector<2x16x1xf32>
    %c1 = arith.constant 1 : index
    %c0_7 = arith.constant 0 : index
    %9 = vector.load %arg3[%c1, %c0_7] : memref<16x128xf32, #tpu.memory_space<vmem>>, vector<1x64xf32>
    %10 = vector.shape_cast %9 : vector<1x64xf32> to vector<1x1x64xf32>
    %11 = vector.broadcast %8 : vector<2x16x1xf32> to vector<2x16x64xf32>
    %12 = vector.broadcast %10 : vector<1x1x64xf32> to vector<2x16x64xf32>
    %13 = arith.mulf %11, %12 : vector<2x16x64xf32>
    %14 = arith.addf %7, %13 : vector<2x16x64xf32>
    %15 = vector.extract_strided_slice %14 {offsets = [0, 0, 0], sizes = [2, 16, 32], strides = [1, 1, 1]} : vector<2x16x64xf32> to vector<2x16x32xf32>
    %16 = vector.extract_strided_slice %14 {offsets = [0, 0, 32], sizes = [2, 16, 32], strides = [1, 1, 1]} : vector<2x16x64xf32> to vector<2x16x32xf32>
    %c2 = arith.constant 2 : index
    %c0_8 = arith.constant 0 : index
    %17 = vector.load %arg3[%c2, %c0_8] : memref<16x128xf32, #tpu.memory_space<vmem>>, vector<1x32xf32>
    %18 = vector.extract_strided_slice %1 {offsets = [0, 0, 0], sizes = [2, 16, 1], strides = [1, 1, 1]} : vector<2x16x16xf32> to vector<2x16x1xf32>
    %19 = vector.extract_strided_slice %15 {offsets = [0, 0, 0], sizes = [2, 1, 32], strides = [1, 1, 1]} : vector<2x16x32xf32> to vector<2x1x32xf32>
    %20 = vector.broadcast %18 : vector<2x16x1xf32> to vector<2x16x32xf32>
    %21 = vector.broadcast %19 : vector<2x1x32xf32> to vector<2x16x32xf32>
    %22 = arith.mulf %20, %21 : vector<2x16x32xf32>
    %23 = vector.extract_strided_slice %1 {offsets = [0, 0, 1], sizes = [2, 16, 1], strides = [1, 1, 1]} : vector<2x16x16xf32> to vector<2x16x1xf32>
    %24 = vector.extract_strided_slice %15 {offsets = [0, 1, 0], sizes = [2, 1, 32], strides = [1, 1, 1]} : vector<2x16x32xf32> to vector<2x1x32xf32>
    %25 = vector.broadcast %23 : vector<2x16x1xf32> to vector<2x16x32xf32>
    %26 = vector.broadcast %24 : vector<2x1x32xf32> to vector<2x16x32xf32>
    %27 = arith.mulf %25, %26 : vector<2x16x32xf32>
    %28 = arith.addf %22, %27 : vector<2x16x32xf32>
    %29 = vector.extract_strided_slice %1 {offsets = [0, 0, 2], sizes = [2, 16, 1], strides = [1, 1, 1]} : vector<2x16x16xf32> to vector<2x16x1xf32>
    %30 = vector.extract_strided_slice %15 {offsets = [0, 2, 0], sizes = [2, 1, 32], strides = [1, 1, 1]} : vector<2x16x32xf32> to vector<2x1x32xf32>
    %31 = vector.broadcast %29 : vector<2x16x1xf32> to vector<2x16x32xf32>
    %32 = vector.broadcast %30 : vector<2x1x32xf32> to vector<2x16x32xf32>
    %33 = arith.mulf %31, %32 : vector<2x16x32xf32>
    %34 = arith.addf %28, %33 : vector<2x16x32xf32>
    %35 = vector.extract_strided_slice %1 {offsets = [0, 0, 3], sizes = [2, 16, 1], strides = [1, 1, 1]} : vector<2x16x16xf32> to vector<2x16x1xf32>
    %36 = vector.extract_strided_slice %15 {offsets = [0, 3, 0], sizes = [2, 1, 32], strides = [1, 1, 1]} : vector<2x16x32xf32> to vector<2x1x32xf32>
    %37 = vector.broadcast %35 : vector<2x16x1xf32> to vector<2x16x32xf32>
    %38 = vector.broadcast %36 : vector<2x1x32xf32> to vector<2x16x32xf32>
    %39 = arith.mulf %37, %38 : vector<2x16x32xf32>
    %40 = arith.addf %34, %39 : vector<2x16x32xf32>
    %41 = vector.extract_strided_slice %1 {offsets = [0, 0, 4], sizes = [2, 16, 1], strides = [1, 1, 1]} : vector<2x16x16xf32> to vector<2x16x1xf32>
    %42 = vector.extract_strided_slice %15 {offsets = [0, 4, 0], sizes = [2, 1, 32], strides = [1, 1, 1]} : vector<2x16x32xf32> to vector<2x1x32xf32>
    %43 = vector.broadcast %41 : vector<2x16x1xf32> to vector<2x16x32xf32>
    %44 = vector.broadcast %42 : vector<2x1x32xf32> to vector<2x16x32xf32>
    %45 = arith.mulf %43, %44 : vector<2x16x32xf32>
    %46 = arith.addf %40, %45 : vector<2x16x32xf32>
    %47 = vector.extract_strided_slice %1 {offsets = [0, 0, 5], sizes = [2, 16, 1], strides = [1, 1, 1]} : vector<2x16x16xf32> to vector<2x16x1xf32>
    %48 = vector.extract_strided_slice %15 {offsets = [0, 5, 0], sizes = [2, 1, 32], strides = [1, 1, 1]} : vector<2x16x32xf32> to vector<2x1x32xf32>
    %49 = vector.broadcast %47 : vector<2x16x1xf32> to vector<2x16x32xf32>
    %50 = vector.broadcast %48 : vector<2x1x32xf32> to vector<2x16x32xf32>
    %51 = arith.mulf %49, %50 : vector<2x16x32xf32>
    %52 = arith.addf %46, %51 : vector<2x16x32xf32>
    %53 = vector.extract_strided_slice %1 {offsets = [0, 0, 6], sizes = [2, 16, 1], strides = [1, 1, 1]} : vector<2x16x16xf32> to vector<2x16x1xf32>
    %54 = vector.extract_strided_slice %15 {offsets = [0, 6, 0], sizes = [2, 1, 32], strides = [1, 1, 1]} : vector<2x16x32xf32> to vector<2x1x32xf32>
    %55 = vector.broadcast %53 : vector<2x16x1xf32> to vector<2x16x32xf32>
    %56 = vector.broadcast %54 : vector<2x1x32xf32> to vector<2x16x32xf32>
    %57 = arith.mulf %55, %56 : vector<2x16x32xf32>
    %58 = arith.addf %52, %57 : vector<2x16x32xf32>
    %59 = vector.extract_strided_slice %1 {offsets = [0, 0, 7], sizes = [2, 16, 1], strides = [1, 1, 1]} : vector<2x16x16xf32> to vector<2x16x1xf32>
    %60 = vector.extract_strided_slice %15 {offsets = [0, 7, 0], sizes = [2, 1, 32], strides = [1, 1, 1]} : vector<2x16x32xf32> to vector<2x1x32xf32>
    %61 = vector.broadcast %59 : vector<2x16x1xf32> to vector<2x16x32xf32>
    %62 = vector.broadcast %60 : vector<2x1x32xf32> to vector<2x16x32xf32>
    %63 = arith.mulf %61, %62 : vector<2x16x32xf32>
    %64 = arith.addf %58, %63 : vector<2x16x32xf32>
    %65 = vector.extract_strided_slice %1 {offsets = [0, 0, 8], sizes = [2, 16, 1], strides = [1, 1, 1]} : vector<2x16x16xf32> to vector<2x16x1xf32>
    %66 = vector.extract_strided_slice %15 {offsets = [0, 8, 0], sizes = [2, 1, 32], strides = [1, 1, 1]} : vector<2x16x32xf32> to vector<2x1x32xf32>
    %67 = vector.broadcast %65 : vector<2x16x1xf32> to vector<2x16x32xf32>
    %68 = vector.broadcast %66 : vector<2x1x32xf32> to vector<2x16x32xf32>
    %69 = arith.mulf %67, %68 : vector<2x16x32xf32>
    %70 = arith.addf %64, %69 : vector<2x16x32xf32>
    %71 = vector.extract_strided_slice %1 {offsets = [0, 0, 9], sizes = [2, 16, 1], strides = [1, 1, 1]} : vector<2x16x16xf32> to vector<2x16x1xf32>
    %72 = vector.extract_strided_slice %15 {offsets = [0, 9, 0], sizes = [2, 1, 32], strides = [1, 1, 1]} : vector<2x16x32xf32> to vector<2x1x32xf32>
    %73 = vector.broadcast %71 : vector<2x16x1xf32> to vector<2x16x32xf32>
    %74 = vector.broadcast %72 : vector<2x1x32xf32> to vector<2x16x32xf32>
    %75 = arith.mulf %73, %74 : vector<2x16x32xf32>
    %76 = arith.addf %70, %75 : vector<2x16x32xf32>
    %77 = vector.extract_strided_slice %1 {offsets = [0, 0, 10], sizes = [2, 16, 1], strides = [1, 1, 1]} : vector<2x16x16xf32> to vector<2x16x1xf32>
    %78 = vector.extract_strided_slice %15 {offsets = [0, 10, 0], sizes = [2, 1, 32], strides = [1, 1, 1]} : vector<2x16x32xf32> to vector<2x1x32xf32>
    %79 = vector.broadcast %77 : vector<2x16x1xf32> to vector<2x16x32xf32>
    %80 = vector.broadcast %78 : vector<2x1x32xf32> to vector<2x16x32xf32>
    %81 = arith.mulf %79, %80 : vector<2x16x32xf32>
    %82 = arith.addf %76, %81 : vector<2x16x32xf32>
    %83 = vector.extract_strided_slice %1 {offsets = [0, 0, 11], sizes = [2, 16, 1], strides = [1, 1, 1]} : vector<2x16x16xf32> to vector<2x16x1xf32>
    %84 = vector.extract_strided_slice %15 {offsets = [0, 11, 0], sizes = [2, 1, 32], strides = [1, 1, 1]} : vector<2x16x32xf32> to vector<2x1x32xf32>
    %85 = vector.broadcast %83 : vector<2x16x1xf32> to vector<2x16x32xf32>
    %86 = vector.broadcast %84 : vector<2x1x32xf32> to vector<2x16x32xf32>
    %87 = arith.mulf %85, %86 : vector<2x16x32xf32>
    %88 = arith.addf %82, %87 : vector<2x16x32xf32>
    %89 = vector.extract_strided_slice %1 {offsets = [0, 0, 12], sizes = [2, 16, 1], strides = [1, 1, 1]} : vector<2x16x16xf32> to vector<2x16x1xf32>
    %90 = vector.extract_strided_slice %15 {offsets = [0, 12, 0], sizes = [2, 1, 32], strides = [1, 1, 1]} : vector<2x16x32xf32> to vector<2x1x32xf32>
    %91 = vector.broadcast %89 : vector<2x16x1xf32> to vector<2x16x32xf32>
    %92 = vector.broadcast %90 : vector<2x1x32xf32> to vector<2x16x32xf32>
    %93 = arith.mulf %91, %92 : vector<2x16x32xf32>
    %94 = arith.addf %88, %93 : vector<2x16x32xf32>
    %95 = vector.extract_strided_slice %1 {offsets = [0, 0, 13], sizes = [2, 16, 1], strides = [1, 1, 1]} : vector<2x16x16xf32> to vector<2x16x1xf32>
    %96 = vector.extract_strided_slice %15 {offsets = [0, 13, 0], sizes = [2, 1, 32], strides = [1, 1, 1]} : vector<2x16x32xf32> to vector<2x1x32xf32>
    %97 = vector.broadcast %95 : vector<2x16x1xf32> to vector<2x16x32xf32>
    %98 = vector.broadcast %96 : vector<2x1x32xf32> to vector<2x16x32xf32>
    %99 = arith.mulf %97, %98 : vector<2x16x32xf32>
    %100 = arith.addf %94, %99 : vector<2x16x32xf32>
    %101 = vector.extract_strided_slice %1 {offsets = [0, 0, 14], sizes = [2, 16, 1], strides = [1, 1, 1]} : vector<2x16x16xf32> to vector<2x16x1xf32>
    %102 = vector.extract_strided_slice %15 {offsets = [0, 14, 0], sizes = [2, 1, 32], strides = [1, 1, 1]} : vector<2x16x32xf32> to vector<2x1x32xf32>
    %103 = vector.broadcast %101 : vector<2x16x1xf32> to vector<2x16x32xf32>
    %104 = vector.broadcast %102 : vector<2x1x32xf32> to vector<2x16x32xf32>
    %105 = arith.mulf %103, %104 : vector<2x16x32xf32>
    %106 = arith.addf %100, %105 : vector<2x16x32xf32>
    %107 = vector.extract_strided_slice %1 {offsets = [0, 0, 15], sizes = [2, 16, 1], strides = [1, 1, 1]} : vector<2x16x16xf32> to vector<2x16x1xf32>
    %108 = vector.extract_strided_slice %15 {offsets = [0, 15, 0], sizes = [2, 1, 32], strides = [1, 1, 1]} : vector<2x16x32xf32> to vector<2x1x32xf32>
    %109 = vector.broadcast %107 : vector<2x16x1xf32> to vector<2x16x32xf32>
    %110 = vector.broadcast %108 : vector<2x1x32xf32> to vector<2x16x32xf32>
    %111 = arith.mulf %109, %110 : vector<2x16x32xf32>
    %112 = arith.addf %106, %111 : vector<2x16x32xf32>
    %113 = arith.addf %112, %16 : vector<2x16x32xf32>
    %114 = vector.shape_cast %17 : vector<1x32xf32> to vector<1x1x32xf32>
    %115 = vector.broadcast %114 : vector<1x1x32xf32> to vector<2x16x32xf32>
    %116 = arith.addf %113, %115 : vector<2x16x32xf32>
    %c5 = arith.constant 5 : index
    %c0_9 = arith.constant 0 : index
    %117 = vector.load %arg3[%c5, %c0_9] : memref<16x128xf32, #tpu.memory_space<vmem>>, vector<1x32xf32>
    %c6 = arith.constant 6 : index
    %c0_10 = arith.constant 0 : index
    %118 = vector.load %arg3[%c6, %c0_10] : memref<16x128xf32, #tpu.memory_space<vmem>>, vector<1x32xf32>
    %cst = arith.constant dense<0.000000e+00> : vector<32xf32>
    %119 = vector.multi_reduction <add>, %116, %cst [0, 1] : vector<2x16x32xf32> to vector<32xf32>
    %120 = vector.shape_cast %119 : vector<32xf32> to vector<1x1x32xf32>
    %cst_11 = arith.constant 3.200000e+01 : f32
    %121 = vector.broadcast %cst_11 : f32 to vector<1x1x32xf32>
    %122 = arith.divf %120, %121 : vector<1x1x32xf32>
    %123 = vector.broadcast %122 : vector<1x1x32xf32> to vector<2x16x32xf32>
    %124 = arith.subf %116, %123 : vector<2x16x32xf32>
    %125 = arith.mulf %124, %124 : vector<2x16x32xf32>
    %cst_12 = arith.constant dense<0.000000e+00> : vector<32xf32>
    %126 = vector.multi_reduction <add>, %125, %cst_12 [0, 1] : vector<2x16x32xf32> to vector<32xf32>
    %127 = vector.shape_cast %126 : vector<32xf32> to vector<1x1x32xf32>
    %cst_13 = arith.constant 3.200000e+01 : f32
    %128 = vector.broadcast %cst_13 : f32 to vector<1x1x32xf32>
    %129 = arith.divf %127, %128 : vector<1x1x32xf32>
    %cst_14 = arith.constant 9.99999974E-6 : f32
    %130 = vector.broadcast %cst_14 : f32 to vector<1x1x32xf32>
    %131 = arith.addf %129, %130 : vector<1x1x32xf32>
    %132 = math.rsqrt %131 : vector<1x1x32xf32>
    %133 = vector.shape_cast %117 : vector<1x32xf32> to vector<1x1x32xf32>
    %134 = arith.mulf %133, %132 : vector<1x1x32xf32>
    %135 = arith.mulf %122, %134 : vector<1x1x32xf32>
    %136 = vector.shape_cast %118 : vector<1x32xf32> to vector<1x1x32xf32>
    %137 = arith.subf %136, %135 : vector<1x1x32xf32>
    %138 = vector.broadcast %134 : vector<1x1x32xf32> to vector<2x16x32xf32>
    %139 = arith.mulf %116, %138 : vector<2x16x32xf32>
    %140 = vector.broadcast %137 : vector<1x1x32xf32> to vector<2x16x32xf32>
    %141 = arith.addf %139, %140 : vector<2x16x32xf32>
    %cst_15 = arith.constant 0.000000e+00 : f32
    %142 = vector.broadcast %cst_15 : f32 to vector<2x16x32xf32>
    %143 = arith.maximumf %141, %142 : vector<2x16x32xf32>
    %c0_16 = arith.constant 0 : index
    %c0_17 = arith.constant 0 : index
    %144 = vector.load %arg2[%c0_16, %c0_17] : memref<64x128xbf16, #tpu.memory_space<vmem>>, vector<32x64xbf16>
    %145 = vector.shape_cast %143 : vector<2x16x32xf32> to vector<32x32xf32>
    %146 = arith.truncf %145 : vector<32x32xf32> to vector<32x32xbf16>
    %cst_18 = arith.constant dense<0.000000e+00> : vector<32x64xf32>
    %147 = tpu.matmul %146, %144, %cst_18 {dimension_numbers = #tpu.dot_dimension_numbers<[1], [0], [0], [1], [0, 0, 1, 1], [], []>} : vector<32x32xbf16>, vector<32x64xbf16>, vector<32x64xf32> -> vector<32x64xf32>
    %148 = vector.shape_cast %147 : vector<32x64xf32> to vector<2x16x64xf32>
    %149 = vector.extract_strided_slice %148 {offsets = [0, 0, 0], sizes = [2, 16, 32], strides = [1, 1, 1]} : vector<2x16x64xf32> to vector<2x16x32xf32>
    %150 = vector.extract_strided_slice %148 {offsets = [0, 0, 32], sizes = [2, 16, 32], strides = [1, 1, 1]} : vector<2x16x64xf32> to vector<2x16x32xf32>
    %c3 = arith.constant 3 : index
    %c0_19 = arith.constant 0 : index
    %151 = vector.load %arg3[%c3, %c0_19] : memref<16x128xf32, #tpu.memory_space<vmem>>, vector<1x32xf32>
    %152 = vector.extract_strided_slice %1 {offsets = [0, 0, 0], sizes = [2, 16, 1], strides = [1, 1, 1]} : vector<2x16x16xf32> to vector<2x16x1xf32>
    %153 = vector.extract_strided_slice %149 {offsets = [0, 0, 0], sizes = [2, 1, 32], strides = [1, 1, 1]} : vector<2x16x32xf32> to vector<2x1x32xf32>
    %154 = vector.broadcast %152 : vector<2x16x1xf32> to vector<2x16x32xf32>
    %155 = vector.broadcast %153 : vector<2x1x32xf32> to vector<2x16x32xf32>
    %156 = arith.mulf %154, %155 : vector<2x16x32xf32>
    %157 = vector.extract_strided_slice %1 {offsets = [0, 0, 1], sizes = [2, 16, 1], strides = [1, 1, 1]} : vector<2x16x16xf32> to vector<2x16x1xf32>
    %158 = vector.extract_strided_slice %149 {offsets = [0, 1, 0], sizes = [2, 1, 32], strides = [1, 1, 1]} : vector<2x16x32xf32> to vector<2x1x32xf32>
    %159 = vector.broadcast %157 : vector<2x16x1xf32> to vector<2x16x32xf32>
    %160 = vector.broadcast %158 : vector<2x1x32xf32> to vector<2x16x32xf32>
    %161 = arith.mulf %159, %160 : vector<2x16x32xf32>
    %162 = arith.addf %156, %161 : vector<2x16x32xf32>
    %163 = vector.extract_strided_slice %1 {offsets = [0, 0, 2], sizes = [2, 16, 1], strides = [1, 1, 1]} : vector<2x16x16xf32> to vector<2x16x1xf32>
    %164 = vector.extract_strided_slice %149 {offsets = [0, 2, 0], sizes = [2, 1, 32], strides = [1, 1, 1]} : vector<2x16x32xf32> to vector<2x1x32xf32>
    %165 = vector.broadcast %163 : vector<2x16x1xf32> to vector<2x16x32xf32>
    %166 = vector.broadcast %164 : vector<2x1x32xf32> to vector<2x16x32xf32>
    %167 = arith.mulf %165, %166 : vector<2x16x32xf32>
    %168 = arith.addf %162, %167 : vector<2x16x32xf32>
    %169 = vector.extract_strided_slice %1 {offsets = [0, 0, 3], sizes = [2, 16, 1], strides = [1, 1, 1]} : vector<2x16x16xf32> to vector<2x16x1xf32>
    %170 = vector.extract_strided_slice %149 {offsets = [0, 3, 0], sizes = [2, 1, 32], strides = [1, 1, 1]} : vector<2x16x32xf32> to vector<2x1x32xf32>
    %171 = vector.broadcast %169 : vector<2x16x1xf32> to vector<2x16x32xf32>
    %172 = vector.broadcast %170 : vector<2x1x32xf32> to vector<2x16x32xf32>
    %173 = arith.mulf %171, %172 : vector<2x16x32xf32>
    %174 = arith.addf %168, %173 : vector<2x16x32xf32>
    %175 = vector.extract_strided_slice %1 {offsets = [0, 0, 4], sizes = [2, 16, 1], strides = [1, 1, 1]} : vector<2x16x16xf32> to vector<2x16x1xf32>
    %176 = vector.extract_strided_slice %149 {offsets = [0, 4, 0], sizes = [2, 1, 32], strides = [1, 1, 1]} : vector<2x16x32xf32> to vector<2x1x32xf32>
    %177 = vector.broadcast %175 : vector<2x16x1xf32> to vector<2x16x32xf32>
    %178 = vector.broadcast %176 : vector<2x1x32xf32> to vector<2x16x32xf32>
    %179 = arith.mulf %177, %178 : vector<2x16x32xf32>
    %180 = arith.addf %174, %179 : vector<2x16x32xf32>
    %181 = vector.extract_strided_slice %1 {offsets = [0, 0, 5], sizes = [2, 16, 1], strides = [1, 1, 1]} : vector<2x16x16xf32> to vector<2x16x1xf32>
    %182 = vector.extract_strided_slice %149 {offsets = [0, 5, 0], sizes = [2, 1, 32], strides = [1, 1, 1]} : vector<2x16x32xf32> to vector<2x1x32xf32>
    %183 = vector.broadcast %181 : vector<2x16x1xf32> to vector<2x16x32xf32>
    %184 = vector.broadcast %182 : vector<2x1x32xf32> to vector<2x16x32xf32>
    %185 = arith.mulf %183, %184 : vector<2x16x32xf32>
    %186 = arith.addf %180, %185 : vector<2x16x32xf32>
    %187 = vector.extract_strided_slice %1 {offsets = [0, 0, 6], sizes = [2, 16, 1], strides = [1, 1, 1]} : vector<2x16x16xf32> to vector<2x16x1xf32>
    %188 = vector.extract_strided_slice %149 {offsets = [0, 6, 0], sizes = [2, 1, 32], strides = [1, 1, 1]} : vector<2x16x32xf32> to vector<2x1x32xf32>
    %189 = vector.broadcast %187 : vector<2x16x1xf32> to vector<2x16x32xf32>
    %190 = vector.broadcast %188 : vector<2x1x32xf32> to vector<2x16x32xf32>
    %191 = arith.mulf %189, %190 : vector<2x16x32xf32>
    %192 = arith.addf %186, %191 : vector<2x16x32xf32>
    %193 = vector.extract_strided_slice %1 {offsets = [0, 0, 7], sizes = [2, 16, 1], strides = [1, 1, 1]} : vector<2x16x16xf32> to vector<2x16x1xf32>
    %194 = vector.extract_strided_slice %149 {offsets = [0, 7, 0], sizes = [2, 1, 32], strides = [1, 1, 1]} : vector<2x16x32xf32> to vector<2x1x32xf32>
    %195 = vector.broadcast %193 : vector<2x16x1xf32> to vector<2x16x32xf32>
    %196 = vector.broadcast %194 : vector<2x1x32xf32> to vector<2x16x32xf32>
    %197 = arith.mulf %195, %196 : vector<2x16x32xf32>
    %198 = arith.addf %192, %197 : vector<2x16x32xf32>
    %199 = vector.extract_strided_slice %1 {offsets = [0, 0, 8], sizes = [2, 16, 1], strides = [1, 1, 1]} : vector<2x16x16xf32> to vector<2x16x1xf32>
    %200 = vector.extract_strided_slice %149 {offsets = [0, 8, 0], sizes = [2, 1, 32], strides = [1, 1, 1]} : vector<2x16x32xf32> to vector<2x1x32xf32>
    %201 = vector.broadcast %199 : vector<2x16x1xf32> to vector<2x16x32xf32>
    %202 = vector.broadcast %200 : vector<2x1x32xf32> to vector<2x16x32xf32>
    %203 = arith.mulf %201, %202 : vector<2x16x32xf32>
    %204 = arith.addf %198, %203 : vector<2x16x32xf32>
    %205 = vector.extract_strided_slice %1 {offsets = [0, 0, 9], sizes = [2, 16, 1], strides = [1, 1, 1]} : vector<2x16x16xf32> to vector<2x16x1xf32>
    %206 = vector.extract_strided_slice %149 {offsets = [0, 9, 0], sizes = [2, 1, 32], strides = [1, 1, 1]} : vector<2x16x32xf32> to vector<2x1x32xf32>
    %207 = vector.broadcast %205 : vector<2x16x1xf32> to vector<2x16x32xf32>
    %208 = vector.broadcast %206 : vector<2x1x32xf32> to vector<2x16x32xf32>
    %209 = arith.mulf %207, %208 : vector<2x16x32xf32>
    %210 = arith.addf %204, %209 : vector<2x16x32xf32>
    %211 = vector.extract_strided_slice %1 {offsets = [0, 0, 10], sizes = [2, 16, 1], strides = [1, 1, 1]} : vector<2x16x16xf32> to vector<2x16x1xf32>
    %212 = vector.extract_strided_slice %149 {offsets = [0, 10, 0], sizes = [2, 1, 32], strides = [1, 1, 1]} : vector<2x16x32xf32> to vector<2x1x32xf32>
    %213 = vector.broadcast %211 : vector<2x16x1xf32> to vector<2x16x32xf32>
    %214 = vector.broadcast %212 : vector<2x1x32xf32> to vector<2x16x32xf32>
    %215 = arith.mulf %213, %214 : vector<2x16x32xf32>
    %216 = arith.addf %210, %215 : vector<2x16x32xf32>
    %217 = vector.extract_strided_slice %1 {offsets = [0, 0, 11], sizes = [2, 16, 1], strides = [1, 1, 1]} : vector<2x16x16xf32> to vector<2x16x1xf32>
    %218 = vector.extract_strided_slice %149 {offsets = [0, 11, 0], sizes = [2, 1, 32], strides = [1, 1, 1]} : vector<2x16x32xf32> to vector<2x1x32xf32>
    %219 = vector.broadcast %217 : vector<2x16x1xf32> to vector<2x16x32xf32>
    %220 = vector.broadcast %218 : vector<2x1x32xf32> to vector<2x16x32xf32>
    %221 = arith.mulf %219, %220 : vector<2x16x32xf32>
    %222 = arith.addf %216, %221 : vector<2x16x32xf32>
    %223 = vector.extract_strided_slice %1 {offsets = [0, 0, 12], sizes = [2, 16, 1], strides = [1, 1, 1]} : vector<2x16x16xf32> to vector<2x16x1xf32>
    %224 = vector.extract_strided_slice %149 {offsets = [0, 12, 0], sizes = [2, 1, 32], strides = [1, 1, 1]} : vector<2x16x32xf32> to vector<2x1x32xf32>
    %225 = vector.broadcast %223 : vector<2x16x1xf32> to vector<2x16x32xf32>
    %226 = vector.broadcast %224 : vector<2x1x32xf32> to vector<2x16x32xf32>
    %227 = arith.mulf %225, %226 : vector<2x16x32xf32>
    %228 = arith.addf %222, %227 : vector<2x16x32xf32>
    %229 = vector.extract_strided_slice %1 {offsets = [0, 0, 13], sizes = [2, 16, 1], strides = [1, 1, 1]} : vector<2x16x16xf32> to vector<2x16x1xf32>
    %230 = vector.extract_strided_slice %149 {offsets = [0, 13, 0], sizes = [2, 1, 32], strides = [1, 1, 1]} : vector<2x16x32xf32> to vector<2x1x32xf32>
    %231 = vector.broadcast %229 : vector<2x16x1xf32> to vector<2x16x32xf32>
    %232 = vector.broadcast %230 : vector<2x1x32xf32> to vector<2x16x32xf32>
    %233 = arith.mulf %231, %232 : vector<2x16x32xf32>
    %234 = arith.addf %228, %233 : vector<2x16x32xf32>
    %235 = vector.extract_strided_slice %1 {offsets = [0, 0, 14], sizes = [2, 16, 1], strides = [1, 1, 1]} : vector<2x16x16xf32> to vector<2x16x1xf32>
    %236 = vector.extract_strided_slice %149 {offsets = [0, 14, 0], sizes = [2, 1, 32], strides = [1, 1, 1]} : vector<2x16x32xf32> to vector<2x1x32xf32>
    %237 = vector.broadcast %235 : vector<2x16x1xf32> to vector<2x16x32xf32>
    %238 = vector.broadcast %236 : vector<2x1x32xf32> to vector<2x16x32xf32>
    %239 = arith.mulf %237, %238 : vector<2x16x32xf32>
    %240 = arith.addf %234, %239 : vector<2x16x32xf32>
    %241 = vector.extract_strided_slice %1 {offsets = [0, 0, 15], sizes = [2, 16, 1], strides = [1, 1, 1]} : vector<2x16x16xf32> to vector<2x16x1xf32>
    %242 = vector.extract_strided_slice %149 {offsets = [0, 15, 0], sizes = [2, 1, 32], strides = [1, 1, 1]} : vector<2x16x32xf32> to vector<2x1x32xf32>
    %243 = vector.broadcast %241 : vector<2x16x1xf32> to vector<2x16x32xf32>
    %244 = vector.broadcast %242 : vector<2x1x32xf32> to vector<2x16x32xf32>
    %245 = arith.mulf %243, %244 : vector<2x16x32xf32>
    %246 = arith.addf %240, %245 : vector<2x16x32xf32>
    %247 = arith.addf %246, %150 : vector<2x16x32xf32>
    %248 = vector.shape_cast %151 : vector<1x32xf32> to vector<1x1x32xf32>
    %249 = vector.broadcast %248 : vector<1x1x32xf32> to vector<2x16x32xf32>
    %250 = arith.addf %247, %249 : vector<2x16x32xf32>
    %c7 = arith.constant 7 : index
    %c0_20 = arith.constant 0 : index
    %251 = vector.load %arg3[%c7, %c0_20] : memref<16x128xf32, #tpu.memory_space<vmem>>, vector<1x32xf32>
    %c8 = arith.constant 8 : index
    %c0_21 = arith.constant 0 : index
    %252 = vector.load %arg3[%c8, %c0_21] : memref<16x128xf32, #tpu.memory_space<vmem>>, vector<1x32xf32>
    %cst_22 = arith.constant dense<0.000000e+00> : vector<32xf32>
    %253 = vector.multi_reduction <add>, %250, %cst_22 [0, 1] : vector<2x16x32xf32> to vector<32xf32>
    %254 = vector.shape_cast %253 : vector<32xf32> to vector<1x1x32xf32>
    %cst_23 = arith.constant 3.200000e+01 : f32
    %255 = vector.broadcast %cst_23 : f32 to vector<1x1x32xf32>
    %256 = arith.divf %254, %255 : vector<1x1x32xf32>
    %257 = vector.broadcast %256 : vector<1x1x32xf32> to vector<2x16x32xf32>
    %258 = arith.subf %250, %257 : vector<2x16x32xf32>
    %259 = arith.mulf %258, %258 : vector<2x16x32xf32>
    %cst_24 = arith.constant dense<0.000000e+00> : vector<32xf32>
    %260 = vector.multi_reduction <add>, %259, %cst_24 [0, 1] : vector<2x16x32xf32> to vector<32xf32>
    %261 = vector.shape_cast %260 : vector<32xf32> to vector<1x1x32xf32>
    %cst_25 = arith.constant 3.200000e+01 : f32
    %262 = vector.broadcast %cst_25 : f32 to vector<1x1x32xf32>
    %263 = arith.divf %261, %262 : vector<1x1x32xf32>
    %cst_26 = arith.constant 9.99999974E-6 : f32
    %264 = vector.broadcast %cst_26 : f32 to vector<1x1x32xf32>
    %265 = arith.addf %263, %264 : vector<1x1x32xf32>
    %266 = math.rsqrt %265 : vector<1x1x32xf32>
    %267 = vector.shape_cast %251 : vector<1x32xf32> to vector<1x1x32xf32>
    %268 = arith.mulf %267, %266 : vector<1x1x32xf32>
    %269 = arith.mulf %256, %268 : vector<1x1x32xf32>
    %270 = vector.shape_cast %252 : vector<1x32xf32> to vector<1x1x32xf32>
    %271 = arith.subf %270, %269 : vector<1x1x32xf32>
    %272 = vector.broadcast %268 : vector<1x1x32xf32> to vector<2x16x32xf32>
    %273 = arith.mulf %250, %272 : vector<2x16x32xf32>
    %274 = vector.broadcast %271 : vector<1x1x32xf32> to vector<2x16x32xf32>
    %275 = arith.addf %273, %274 : vector<2x16x32xf32>
    %cst_27 = arith.constant 0.000000e+00 : f32
    %276 = vector.broadcast %cst_27 : f32 to vector<2x16x32xf32>
    %277 = arith.maximumf %275, %276 : vector<2x16x32xf32>
    %c32 = arith.constant 32 : index
    %c0_28 = arith.constant 0 : index
    %278 = vector.load %arg2[%c32, %c0_28] : memref<64x128xbf16, #tpu.memory_space<vmem>>, vector<32x16xbf16>
    %279 = vector.shape_cast %277 : vector<2x16x32xf32> to vector<32x32xf32>
    %280 = arith.truncf %279 : vector<32x32xf32> to vector<32x32xbf16>
    %cst_29 = arith.constant dense<0.000000e+00> : vector<32x16xf32>
    %281 = tpu.matmul %280, %278, %cst_29 {dimension_numbers = #tpu.dot_dimension_numbers<[1], [0], [0], [1], [0, 0, 1, 1], [], []>} : vector<32x32xbf16>, vector<32x16xbf16>, vector<32x16xf32> -> vector<32x16xf32>
    %282 = vector.shape_cast %281 : vector<32x16xf32> to vector<2x16x16xf32>
    %283 = vector.extract_strided_slice %282 {offsets = [0, 0, 0], sizes = [2, 16, 8], strides = [1, 1, 1]} : vector<2x16x16xf32> to vector<2x16x8xf32>
    %284 = vector.extract_strided_slice %282 {offsets = [0, 0, 8], sizes = [2, 16, 8], strides = [1, 1, 1]} : vector<2x16x16xf32> to vector<2x16x8xf32>
    %c4 = arith.constant 4 : index
    %c0_30 = arith.constant 0 : index
    %285 = vector.load %arg3[%c4, %c0_30] : memref<16x128xf32, #tpu.memory_space<vmem>>, vector<1x8xf32>
    %286 = vector.extract_strided_slice %1 {offsets = [0, 0, 0], sizes = [2, 16, 1], strides = [1, 1, 1]} : vector<2x16x16xf32> to vector<2x16x1xf32>
    %287 = vector.extract_strided_slice %283 {offsets = [0, 0, 0], sizes = [2, 1, 8], strides = [1, 1, 1]} : vector<2x16x8xf32> to vector<2x1x8xf32>
    %288 = vector.broadcast %286 : vector<2x16x1xf32> to vector<2x16x8xf32>
    %289 = vector.broadcast %287 : vector<2x1x8xf32> to vector<2x16x8xf32>
    %290 = arith.mulf %288, %289 : vector<2x16x8xf32>
    %291 = vector.extract_strided_slice %1 {offsets = [0, 0, 1], sizes = [2, 16, 1], strides = [1, 1, 1]} : vector<2x16x16xf32> to vector<2x16x1xf32>
    %292 = vector.extract_strided_slice %283 {offsets = [0, 1, 0], sizes = [2, 1, 8], strides = [1, 1, 1]} : vector<2x16x8xf32> to vector<2x1x8xf32>
    %293 = vector.broadcast %291 : vector<2x16x1xf32> to vector<2x16x8xf32>
    %294 = vector.broadcast %292 : vector<2x1x8xf32> to vector<2x16x8xf32>
    %295 = arith.mulf %293, %294 : vector<2x16x8xf32>
    %296 = arith.addf %290, %295 : vector<2x16x8xf32>
    %297 = vector.extract_strided_slice %1 {offsets = [0, 0, 2], sizes = [2, 16, 1], strides = [1, 1, 1]} : vector<2x16x16xf32> to vector<2x16x1xf32>
    %298 = vector.extract_strided_slice %283 {offsets = [0, 2, 0], sizes = [2, 1, 8], strides = [1, 1, 1]} : vector<2x16x8xf32> to vector<2x1x8xf32>
    %299 = vector.broadcast %297 : vector<2x16x1xf32> to vector<2x16x8xf32>
    %300 = vector.broadcast %298 : vector<2x1x8xf32> to vector<2x16x8xf32>
    %301 = arith.mulf %299, %300 : vector<2x16x8xf32>
    %302 = arith.addf %296, %301 : vector<2x16x8xf32>
    %303 = vector.extract_strided_slice %1 {offsets = [0, 0, 3], sizes = [2, 16, 1], strides = [1, 1, 1]} : vector<2x16x16xf32> to vector<2x16x1xf32>
    %304 = vector.extract_strided_slice %283 {offsets = [0, 3, 0], sizes = [2, 1, 8], strides = [1, 1, 1]} : vector<2x16x8xf32> to vector<2x1x8xf32>
    %305 = vector.broadcast %303 : vector<2x16x1xf32> to vector<2x16x8xf32>
    %306 = vector.broadcast %304 : vector<2x1x8xf32> to vector<2x16x8xf32>
    %307 = arith.mulf %305, %306 : vector<2x16x8xf32>
    %308 = arith.addf %302, %307 : vector<2x16x8xf32>
    %309 = vector.extract_strided_slice %1 {offsets = [0, 0, 4], sizes = [2, 16, 1], strides = [1, 1, 1]} : vector<2x16x16xf32> to vector<2x16x1xf32>
    %310 = vector.extract_strided_slice %283 {offsets = [0, 4, 0], sizes = [2, 1, 8], strides = [1, 1, 1]} : vector<2x16x8xf32> to vector<2x1x8xf32>
    %311 = vector.broadcast %309 : vector<2x16x1xf32> to vector<2x16x8xf32>
    %312 = vector.broadcast %310 : vector<2x1x8xf32> to vector<2x16x8xf32>
    %313 = arith.mulf %311, %312 : vector<2x16x8xf32>
    %314 = arith.addf %308, %313 : vector<2x16x8xf32>
    %315 = vector.extract_strided_slice %1 {offsets = [0, 0, 5], sizes = [2, 16, 1], strides = [1, 1, 1]} : vector<2x16x16xf32> to vector<2x16x1xf32>
    %316 = vector.extract_strided_slice %283 {offsets = [0, 5, 0], sizes = [2, 1, 8], strides = [1, 1, 1]} : vector<2x16x8xf32> to vector<2x1x8xf32>
    %317 = vector.broadcast %315 : vector<2x16x1xf32> to vector<2x16x8xf32>
    %318 = vector.broadcast %316 : vector<2x1x8xf32> to vector<2x16x8xf32>
    %319 = arith.mulf %317, %318 : vector<2x16x8xf32>
    %320 = arith.addf %314, %319 : vector<2x16x8xf32>
    %321 = vector.extract_strided_slice %1 {offsets = [0, 0, 6], sizes = [2, 16, 1], strides = [1, 1, 1]} : vector<2x16x16xf32> to vector<2x16x1xf32>
    %322 = vector.extract_strided_slice %283 {offsets = [0, 6, 0], sizes = [2, 1, 8], strides = [1, 1, 1]} : vector<2x16x8xf32> to vector<2x1x8xf32>
    %323 = vector.broadcast %321 : vector<2x16x1xf32> to vector<2x16x8xf32>
    %324 = vector.broadcast %322 : vector<2x1x8xf32> to vector<2x16x8xf32>
    %325 = arith.mulf %323, %324 : vector<2x16x8xf32>
    %326 = arith.addf %320, %325 : vector<2x16x8xf32>
    %327 = vector.extract_strided_slice %1 {offsets = [0, 0, 7], sizes = [2, 16, 1], strides = [1, 1, 1]} : vector<2x16x16xf32> to vector<2x16x1xf32>
    %328 = vector.extract_strided_slice %283 {offsets = [0, 7, 0], sizes = [2, 1, 8], strides = [1, 1, 1]} : vector<2x16x8xf32> to vector<2x1x8xf32>
    %329 = vector.broadcast %327 : vector<2x16x1xf32> to vector<2x16x8xf32>
    %330 = vector.broadcast %328 : vector<2x1x8xf32> to vector<2x16x8xf32>
    %331 = arith.mulf %329, %330 : vector<2x16x8xf32>
    %332 = arith.addf %326, %331 : vector<2x16x8xf32>
    %333 = vector.extract_strided_slice %1 {offsets = [0, 0, 8], sizes = [2, 16, 1], strides = [1, 1, 1]} : vector<2x16x16xf32> to vector<2x16x1xf32>
    %334 = vector.extract_strided_slice %283 {offsets = [0, 8, 0], sizes = [2, 1, 8], strides = [1, 1, 1]} : vector<2x16x8xf32> to vector<2x1x8xf32>
    %335 = vector.broadcast %333 : vector<2x16x1xf32> to vector<2x16x8xf32>
    %336 = vector.broadcast %334 : vector<2x1x8xf32> to vector<2x16x8xf32>
    %337 = arith.mulf %335, %336 : vector<2x16x8xf32>
    %338 = arith.addf %332, %337 : vector<2x16x8xf32>
    %339 = vector.extract_strided_slice %1 {offsets = [0, 0, 9], sizes = [2, 16, 1], strides = [1, 1, 1]} : vector<2x16x16xf32> to vector<2x16x1xf32>
    %340 = vector.extract_strided_slice %283 {offsets = [0, 9, 0], sizes = [2, 1, 8], strides = [1, 1, 1]} : vector<2x16x8xf32> to vector<2x1x8xf32>
    %341 = vector.broadcast %339 : vector<2x16x1xf32> to vector<2x16x8xf32>
    %342 = vector.broadcast %340 : vector<2x1x8xf32> to vector<2x16x8xf32>
    %343 = arith.mulf %341, %342 : vector<2x16x8xf32>
    %344 = arith.addf %338, %343 : vector<2x16x8xf32>
    %345 = vector.extract_strided_slice %1 {offsets = [0, 0, 10], sizes = [2, 16, 1], strides = [1, 1, 1]} : vector<2x16x16xf32> to vector<2x16x1xf32>
    %346 = vector.extract_strided_slice %283 {offsets = [0, 10, 0], sizes = [2, 1, 8], strides = [1, 1, 1]} : vector<2x16x8xf32> to vector<2x1x8xf32>
    %347 = vector.broadcast %345 : vector<2x16x1xf32> to vector<2x16x8xf32>
    %348 = vector.broadcast %346 : vector<2x1x8xf32> to vector<2x16x8xf32>
    %349 = arith.mulf %347, %348 : vector<2x16x8xf32>
    %350 = arith.addf %344, %349 : vector<2x16x8xf32>
    %351 = vector.extract_strided_slice %1 {offsets = [0, 0, 11], sizes = [2, 16, 1], strides = [1, 1, 1]} : vector<2x16x16xf32> to vector<2x16x1xf32>
    %352 = vector.extract_strided_slice %283 {offsets = [0, 11, 0], sizes = [2, 1, 8], strides = [1, 1, 1]} : vector<2x16x8xf32> to vector<2x1x8xf32>
    %353 = vector.broadcast %351 : vector<2x16x1xf32> to vector<2x16x8xf32>
    %354 = vector.broadcast %352 : vector<2x1x8xf32> to vector<2x16x8xf32>
    %355 = arith.mulf %353, %354 : vector<2x16x8xf32>
    %356 = arith.addf %350, %355 : vector<2x16x8xf32>
    %357 = vector.extract_strided_slice %1 {offsets = [0, 0, 12], sizes = [2, 16, 1], strides = [1, 1, 1]} : vector<2x16x16xf32> to vector<2x16x1xf32>
    %358 = vector.extract_strided_slice %283 {offsets = [0, 12, 0], sizes = [2, 1, 8], strides = [1, 1, 1]} : vector<2x16x8xf32> to vector<2x1x8xf32>
    %359 = vector.broadcast %357 : vector<2x16x1xf32> to vector<2x16x8xf32>
    %360 = vector.broadcast %358 : vector<2x1x8xf32> to vector<2x16x8xf32>
    %361 = arith.mulf %359, %360 : vector<2x16x8xf32>
    %362 = arith.addf %356, %361 : vector<2x16x8xf32>
    %363 = vector.extract_strided_slice %1 {offsets = [0, 0, 13], sizes = [2, 16, 1], strides = [1, 1, 1]} : vector<2x16x16xf32> to vector<2x16x1xf32>
    %364 = vector.extract_strided_slice %283 {offsets = [0, 13, 0], sizes = [2, 1, 8], strides = [1, 1, 1]} : vector<2x16x8xf32> to vector<2x1x8xf32>
    %365 = vector.broadcast %363 : vector<2x16x1xf32> to vector<2x16x8xf32>
    %366 = vector.broadcast %364 : vector<2x1x8xf32> to vector<2x16x8xf32>
    %367 = arith.mulf %365, %366 : vector<2x16x8xf32>
    %368 = arith.addf %362, %367 : vector<2x16x8xf32>
    %369 = vector.extract_strided_slice %1 {offsets = [0, 0, 14], sizes = [2, 16, 1], strides = [1, 1, 1]} : vector<2x16x16xf32> to vector<2x16x1xf32>
    %370 = vector.extract_strided_slice %283 {offsets = [0, 14, 0], sizes = [2, 1, 8], strides = [1, 1, 1]} : vector<2x16x8xf32> to vector<2x1x8xf32>
    %371 = vector.broadcast %369 : vector<2x16x1xf32> to vector<2x16x8xf32>
    %372 = vector.broadcast %370 : vector<2x1x8xf32> to vector<2x16x8xf32>
    %373 = arith.mulf %371, %372 : vector<2x16x8xf32>
    %374 = arith.addf %368, %373 : vector<2x16x8xf32>
    %375 = vector.extract_strided_slice %1 {offsets = [0, 0, 15], sizes = [2, 16, 1], strides = [1, 1, 1]} : vector<2x16x16xf32> to vector<2x16x1xf32>
    %376 = vector.extract_strided_slice %283 {offsets = [0, 15, 0], sizes = [2, 1, 8], strides = [1, 1, 1]} : vector<2x16x8xf32> to vector<2x1x8xf32>
    %377 = vector.broadcast %375 : vector<2x16x1xf32> to vector<2x16x8xf32>
    %378 = vector.broadcast %376 : vector<2x1x8xf32> to vector<2x16x8xf32>
    %379 = arith.mulf %377, %378 : vector<2x16x8xf32>
    %380 = arith.addf %374, %379 : vector<2x16x8xf32>
    %381 = arith.addf %380, %284 : vector<2x16x8xf32>
    %382 = vector.shape_cast %285 : vector<1x8xf32> to vector<1x1x8xf32>
    %383 = vector.broadcast %382 : vector<1x1x8xf32> to vector<2x16x8xf32>
    %384 = arith.addf %381, %383 : vector<2x16x8xf32>
    %cst_31 = arith.constant 0.000000e+00 : f32
    %385 = vector.broadcast %cst_31 : f32 to vector<2x16x120xf32>
    %386 = tpu.concatenate %384, %385 in 2 : vector<2x16x8xf32>, vector<2x16x120xf32> -> vector<2x16x128xf32>
    %c0_32 = arith.constant 0 : index
    %c0_33 = arith.constant 0 : index
    %c0_34 = arith.constant 0 : index
    %387 = vector.load %arg4[%c0_32, %c0_33, %c0_34] : memref<2x16x128xf32, #tpu.memory_space<vmem>>, vector<2x16x128xf32>
    tpu.vector_store %arg4[%c0_32, %c0_33, %c0_34], %386 {strides = array<i32>} : memref<2x16x128xf32, #tpu.memory_space<vmem>>, vector<2x16x128xf32>,
    return
  }
}

</mosaic_0001>

<llo_original>
// kernel: tpu_custom_call.1
$region0: #{tpu_custom_call.1}
  #allocation0 [shape = 'u32[]', space=smem, size = 0x4, offset = 0x4, fixed_abs, tag = 'smem constant byte address 0x4 - core index']
  #allocation1 [shape = 'u32[144,128]{1,0:T(1,128)}', space=vmem, size = 0x12000, scoped, tag = 'internal scratch']
  %s0 = inlined_call_operand.vmem [shape: f32[2,16,2], index: 0, kind: input, shape index: {}]
  %s1 = inlined_call_operand.vmem [shape: f32[2,16,16], index: 1, kind: input, shape index: {}]
  %s2 = inlined_call_operand.hbm [shape: bf16[64,128], index: 2, kind: input, shape index: {}]
  %s3 = inlined_call_operand.hbm [shape: f32[16,128], index: 3, kind: input, shape index: {}]
  %s4 = inlined_call_operand.hbm [shape: f32[2,16,128], index: 4, kind: output, shape index: {}]
  %s5 = sld [smem:[#allocation0]]
  $region34: #{tpu_custom_call.1} parent=0
    _
  %s7 = ssub.s32 1, %s5
  %s8 = scalar_select 0, %s7, %s5
  $region1: #{tpu_custom_call.1} parent=0
    #allocation2 [shape = 'u8[16384]{0}', space=vmem, size = 0x4000, scoped, tag = 'input window, operand 2, single buffered']
    #allocation3 [shape = 's32[1]{0}', space=sflag, size = 0x4, scoped, tag = 'scoped memory for tpu_custom_call.1']
    #allocation4 [shape = 's32[1]{0}', space=sflag, size = 0x4, scoped, tag = 'scoped memory for tpu_custom_call.1']
    #allocation5 [shape = 'u8[8192]{0}', space=vmem, size = 0x2000, scoped, tag = 'input window, operand 3, single buffered']
    #allocation6 [shape = 's32[1]{0}', space=sflag, size = 0x4, scoped, tag = 'scoped memory for tpu_custom_call.1']
    #allocation7 [shape = 'u8[16384]{0}', space=vmem, size = 0x4000, scoped, tag = 'output window, operand 0, single buffered']
    %9 = vsyncpa [#allocation3], 0
    %10 = vsyncpa [#allocation6], 0
    %11 = vsyncpa [#allocation4], 0
    // Predicated region
    $region2: #{tpu_custom_call.1} parent=1 // pred_check
      _
    $region3: #{tpu_custom_call.1} parent=1 // pred_check_branch
      %13 = sbr.rel (0) target = $region5
    $region4: #{tpu_custom_call.1} parent=1 // pred_region
      _
    $region5: #{tpu_custom_call.1} parent=1 // pred_fallthru
      _
    // Predicated region
    $region6: #{tpu_custom_call.1} parent=1 // pred_check
      _
    $region7: #{tpu_custom_call.1} parent=1 // pred_check_branch
      %15 = sbr.rel (0) target = $region9
    $region8: #{tpu_custom_call.1} parent=1 // pred_region
      _
    $region9: #{tpu_custom_call.1} parent=1 // pred_fallthru
      _
    // Predicated region
    $region10: #{tpu_custom_call.1} parent=1 // pred_check
      _
    $region11: #{tpu_custom_call.1} parent=1 // pred_check_branch
      %17 = sbr.rel (0) target = $region13
    $region12: #{tpu_custom_call.1} parent=1 // pred_region
      %s19 = ssub.s32 512, 512
      %20 = vsyncadd [#allocation3], %s19
      %s21 = sshll.u32 [#allocation2], 4
      %s22 = int_to_ptr.vmem [resolvable:$true] %s21
      %27 = dma.hbm_to_vmem [thread:$0]  %s2, 512, %s22, [#allocation3], 64, 64, 4
    $region13: #{tpu_custom_call.1} parent=1 // pred_fallthru
      _
    // Predicated region
    $region14: #{tpu_custom_call.1} parent=1 // pred_check
      _
    $region15: #{tpu_custom_call.1} parent=1 // pred_check_branch
      %29 = sbr.rel (0) target = $region17
    $region16: #{tpu_custom_call.1} parent=1 // pred_region
      %s31 = ssub.s32 256, 256
      %32 = vsyncadd [#allocation6], %s31
      %s33 = sshll.u32 [#allocation5], 4
      %s34 = int_to_ptr.vmem [resolvable:$true] %s33
      %39 = dma.hbm_to_vmem [thread:$0]  %s3, 256, %s34, [#allocation6], 128, 128, 8
    $region17: #{tpu_custom_call.1} parent=1 // pred_fallthru
      _
    // Predicated region
    $region18: #{tpu_custom_call.1} parent=1 // pred_check
      _
    $region19: #{tpu_custom_call.1} parent=1 // pred_check_branch
      %41 = sbr.rel (0) target = $region21
    $region20: #{tpu_custom_call.1} parent=1 // pred_region
      %42 = dma.done [#allocation3], 512
    $region21: #{tpu_custom_call.1} parent=1 // pred_fallthru
      _
    // Predicated region
    $region22: #{tpu_custom_call.1} parent=1 // pred_check
      _
    $region23: #{tpu_custom_call.1} parent=1 // pred_check_branch
      %44 = sbr.rel (0) target = $region25
    $region24: #{tpu_custom_call.1} parent=1 // pred_region
      %45 = dma.done [#allocation6], 256
    $region25: #{tpu_custom_call.1} parent=1 // pred_fallthru
      _
    %v47 = vld [vmem:[%s0] sm:$0xff]
    %v48 = vld [vmem:[%s0 + $0x8] sm:$0xff]
    %v49 = vld [vmem:[%s0 + $0x10] sm:$0xff]
    %v50 = vld [vmem:[%s0 + $0x18] sm:$0xff]
    %v51 = vld [vmem:[%s1] sm:$0xff]
    %v52 = vld [vmem:[%s1 + $0x8] sm:$0xff]
    %v53 = vld [vmem:[%s1 + $0x10] sm:$0xff]
    %v54 = vld [vmem:[%s1 + $0x18] sm:$0xff]
    %v55 = vld [vmem:[#allocation5] sm:$0x1]
    %57 = vset.pattern.permute.xlu0 0
    %58 = vperm.xlu0 %57, %v47
    %v59 = vpop.permute.xlu0 %58
    %62 = vset.pattern.permute.xlu0 0
    %63 = vperm.xlu0 %62, %v48
    %v64 = vpop.permute.xlu0 %63
    %67 = vset.pattern.permute.xlu0 0
    %68 = vperm.xlu0 %67, %v49
    %v69 = vpop.permute.xlu0 %68
    %72 = vset.pattern.permute.xlu0 0
    %73 = vperm.xlu0 %72, %v50
    %v74 = vpop.permute.xlu0 %73
    %v76 = vlaneseq
    %v77 = vshrl.u32 %v76, 7
    %v78 = vsub.s32 0, %v77
    %v79 = vrot.slane %v55, %v78
    %v80 = vmul.f32 %v59, %v79
    %v81 = vmul.f32 %v64, %v79
    %v82 = vmul.f32 %v69, %v79
    %v83 = vmul.f32 %v74, %v79
    %v84 = vld [vmem:[#allocation5 + $0x1] sm:$0x1]
    %85 = vset.pattern.permute.xlu0 1
    %86 = vperm.xlu0 %85, %v47
    %v87 = vpop.permute.xlu0 %86
    %89 = vset.pattern.permute.xlu0 1
    %90 = vperm.xlu0 %89, %v48
    %v91 = vpop.permute.xlu0 %90
    %93 = vset.pattern.permute.xlu0 1
    %94 = vperm.xlu0 %93, %v49
    %v95 = vpop.permute.xlu0 %94
    %97 = vset.pattern.permute.xlu0 1
    %98 = vperm.xlu0 %97, %v50
    %v99 = vpop.permute.xlu0 %98
    %v101 = vlaneseq
    %v102 = vshrl.u32 %v101, 7
    %v103 = vsub.s32 0, %v102
    %v104 = vrot.slane %v84, %v103
    %v105 = vmul.f32 %v87, %v104
    %v106 = vmul.f32 %v91, %v104
    %v107 = vmul.f32 %v95, %v104
    %v108 = vmul.f32 %v99, %v104
    %v109 = vadd.f32 %v80, %v105
    %v110 = vadd.f32 %v81, %v106
    %v111 = vadd.f32 %v82, %v107
    %v112 = vadd.f32 %v83, %v108
    %v113 = vld [vmem:[#allocation5 + $0x2] sm:$0x1]
    %115 = vset.pattern.permute.xlu0 0
    %116 = vperm.xlu0 %115, %v51
    %v117 = vpop.permute.xlu0 %116
    %120 = vset.pattern.permute.xlu0 0
    %121 = vperm.xlu0 %120, %v52
    %v122 = vpop.permute.xlu0 %121
    %125 = vset.pattern.permute.xlu0 0
    %126 = vperm.xlu0 %125, %v53
    %v127 = vpop.permute.xlu0 %126
    %130 = vset.pattern.permute.xlu0 0
    %131 = vperm.xlu0 %130, %v54
    %v132 = vpop.permute.xlu0 %131
    %v134 = vlaneseq
    %v135 = vshrl.u32 %v134, 7
    %v136 = vsub.s32 0, %v135
    %v137 = vrot.slane %v109, %v136
    %v138 = vlaneseq
    %v139 = vshrl.u32 %v138, 7
    %v140 = vsub.s32 0, %v139
    %v141 = vrot.slane %v111, %v140
    %v142 = vmul.f32 %v117, %v137
    %v143 = vmul.f32 %v122, %v137
    %v144 = vmul.f32 %v127, %v141
    %v145 = vmul.f32 %v132, %v141
    %146 = vset.pattern.permute.xlu0 1
    %147 = vperm.xlu0 %146, %v51
    %v148 = vpop.permute.xlu0 %147
    %150 = vset.pattern.permute.xlu0 1
    %151 = vperm.xlu0 %150, %v52
    %v152 = vpop.permute.xlu0 %151
    %154 = vset.pattern.permute.xlu0 1
    %155 = vperm.xlu0 %154, %v53
    %v156 = vpop.permute.xlu0 %155
    %158 = vset.pattern.permute.xlu0 1
    %159 = vperm.xlu0 %158, %v54
    %v160 = vpop.permute.xlu0 %159
    %v162 = vlaneseq
    %v163 = vshrl.u32 %v162, 7
    %v164 = vsub.s32 1, %v163
    %v165 = vrot.slane %v109, %v164
    %v166 = vlaneseq
    %v167 = vshrl.u32 %v166, 7
    %v168 = vsub.s32 1, %v167
    %v169 = vrot.slane %v111, %v168
    %v170 = vmul.f32 %v148, %v165
    %v171 = vmul.f32 %v152, %v165
    %v172 = vmul.f32 %v156, %v169
    %v173 = vmul.f32 %v160, %v169
    %v174 = vadd.f32 %v142, %v170
    %v175 = vadd.f32 %v143, %v171
    %v176 = vadd.f32 %v144, %v172
    %v177 = vadd.f32 %v145, %v173
    %178 = vset.pattern.permute.xlu0 2
    %179 = vperm.xlu0 %178, %v51
    %v180 = vpop.permute.xlu0 %179
    %182 = vset.pattern.permute.xlu0 2
    %183 = vperm.xlu0 %182, %v52
    %v184 = vpop.permute.xlu0 %183
    %186 = vset.pattern.permute.xlu0 2
    %187 = vperm.xlu0 %186, %v53
    %v188 = vpop.permute.xlu0 %187
    %190 = vset.pattern.permute.xlu0 2
    %191 = vperm.xlu0 %190, %v54
    %v192 = vpop.permute.xlu0 %191
    %v194 = vlaneseq
    %v195 = vshrl.u32 %v194, 7
    %v196 = vsub.s32 2, %v195
    %v197 = vrot.slane %v109, %v196
    %v198 = vlaneseq
    %v199 = vshrl.u32 %v198, 7
    %v200 = vsub.s32 2, %v199
    %v201 = vrot.slane %v111, %v200
    %v202 = vmul.f32 %v180, %v197
    %v203 = vmul.f32 %v184, %v197
    %v204 = vmul.f32 %v188, %v201
    %v205 = vmul.f32 %v192, %v201
    %v206 = vadd.f32 %v174, %v202
    %v207 = vadd.f32 %v175, %v203
    %v208 = vadd.f32 %v176, %v204
    %v209 = vadd.f32 %v177, %v205
    %210 = vset.pattern.permute.xlu0 3
    %211 = vperm.xlu0 %210, %v51
    %v212 = vpop.permute.xlu0 %211
    %214 = vset.pattern.permute.xlu0 3
    %215 = vperm.xlu0 %214, %v52
    %v216 = vpop.permute.xlu0 %215
    %218 = vset.pattern.permute.xlu0 3
    %219 = vperm.xlu0 %218, %v53
    %v220 = vpop.permute.xlu0 %219
    %222 = vset.pattern.permute.xlu0 3
    %223 = vperm.xlu0 %222, %v54
    %v224 = vpop.permute.xlu0 %223
    %v226 = vlaneseq
    %v227 = vshrl.u32 %v226, 7
    %v228 = vsub.s32 3, %v227
    %v229 = vrot.slane %v109, %v228
    %v230 = vlaneseq
    %v231 = vshrl.u32 %v230, 7
    %v232 = vsub.s32 3, %v231
    %v233 = vrot.slane %v111, %v232
    %v234 = vmul.f32 %v212, %v229
    %v235 = vmul.f32 %v216, %v229
    %v236 = vmul.f32 %v220, %v233
    %v237 = vmul.f32 %v224, %v233
    %v238 = vadd.f32 %v206, %v234
    %v239 = vadd.f32 %v207, %v235
    %v240 = vadd.f32 %v208, %v236
    %v241 = vadd.f32 %v209, %v237
    %242 = vset.pattern.permute.xlu0 4
    %243 = vperm.xlu0 %242, %v51
    %v244 = vpop.permute.xlu0 %243
    %246 = vset.pattern.permute.xlu0 4
    %247 = vperm.xlu0 %246, %v52
    %v248 = vpop.permute.xlu0 %247
    %250 = vset.pattern.permute.xlu0 4
    %251 = vperm.xlu0 %250, %v53
    %v252 = vpop.permute.xlu0 %251
    %254 = vset.pattern.permute.xlu0 4
    %255 = vperm.xlu0 %254, %v54
    %v256 = vpop.permute.xlu0 %255
    %v258 = vlaneseq
    %v259 = vshrl.u32 %v258, 7
    %v260 = vsub.s32 4, %v259
    %v261 = vrot.slane %v109, %v260
    %v262 = vlaneseq
    %v263 = vshrl.u32 %v262, 7
    %v264 = vsub.s32 4, %v263
    %v265 = vrot.slane %v111, %v264
    %v266 = vmul.f32 %v244, %v261
    %v267 = vmul.f32 %v248, %v261
    %v268 = vmul.f32 %v252, %v265
    %v269 = vmul.f32 %v256, %v265
    %v270 = vadd.f32 %v238, %v266
    %v271 = vadd.f32 %v239, %v267
    %v272 = vadd.f32 %v240, %v268
    %v273 = vadd.f32 %v241, %v269
    %274 = vset.pattern.permute.xlu0 5
    %275 = vperm.xlu0 %274, %v51
    %v276 = vpop.permute.xlu0 %275
    %278 = vset.pattern.permute.xlu0 5
    %279 = vperm.xlu0 %278, %v52
    %v280 = vpop.permute.xlu0 %279
    %282 = vset.pattern.permute.xlu0 5
    %283 = vperm.xlu0 %282, %v53
    %v284 = vpop.permute.xlu0 %283
    %286 = vset.pattern.permute.xlu0 5
    %287 = vperm.xlu0 %286, %v54
    %v288 = vpop.permute.xlu0 %287
    %v290 = vlaneseq
    %v291 = vshrl.u32 %v290, 7
    %v292 = vsub.s32 5, %v291
    %v293 = vrot.slane %v109, %v292
    %v294 = vlaneseq
    %v295 = vshrl.u32 %v294, 7
    %v296 = vsub.s32 5, %v295
    %v297 = vrot.slane %v111, %v296
    %v298 = vmul.f32 %v276, %v293
    %v299 = vmul.f32 %v280, %v293
    %v300 = vmul.f32 %v284, %v297
    %v301 = vmul.f32 %v288, %v297
    %v302 = vadd.f32 %v270, %v298
    %v303 = vadd.f32 %v271, %v299
    %v304 = vadd.f32 %v272, %v300
    %v305 = vadd.f32 %v273, %v301
    %306 = vset.pattern.permute.xlu0 6
    %307 = vperm.xlu0 %306, %v51
    %v308 = vpop.permute.xlu0 %307
    %310 = vset.pattern.permute.xlu0 6
    %311 = vperm.xlu0 %310, %v52
    %v312 = vpop.permute.xlu0 %311
    %314 = vset.pattern.permute.xlu0 6
    %315 = vperm.xlu0 %314, %v53
    %v316 = vpop.permute.xlu0 %315
    %318 = vset.pattern.permute.xlu0 6
    %319 = vperm.xlu0 %318, %v54
    %v320 = vpop.permute.xlu0 %319
    %v322 = vlaneseq
    %v323 = vshrl.u32 %v322, 7
    %v324 = vsub.s32 6, %v323
    %v325 = vrot.slane %v109, %v324
    %v326 = vlaneseq
    %v327 = vshrl.u32 %v326, 7
    %v328 = vsub.s32 6, %v327
    %v329 = vrot.slane %v111, %v328
    %v330 = vmul.f32 %v308, %v325
    %v331 = vmul.f32 %v312, %v325
    %v332 = vmul.f32 %v316, %v329
    %v333 = vmul.f32 %v320, %v329
    %v334 = vadd.f32 %v302, %v330
    %v335 = vadd.f32 %v303, %v331
    %v336 = vadd.f32 %v304, %v332
    %v337 = vadd.f32 %v305, %v333
    %338 = vset.pattern.permute.xlu0 7
    %339 = vperm.xlu0 %338, %v51
    %v340 = vpop.permute.xlu0 %339
    %342 = vset.pattern.permute.xlu0 7
    %343 = vperm.xlu0 %342, %v52
    %v344 = vpop.permute.xlu0 %343
    %346 = vset.pattern.permute.xlu0 7
    %347 = vperm.xlu0 %346, %v53
    %v348 = vpop.permute.xlu0 %347
    %350 = vset.pattern.permute.xlu0 7
    %351 = vperm.xlu0 %350, %v54
    %v352 = vpop.permute.xlu0 %351
    %v354 = vlaneseq
    %v355 = vshrl.u32 %v354, 7
    %v356 = vsub.s32 7, %v355
    %v357 = vrot.slane %v109, %v356
    %v358 = vlaneseq
    %v359 = vshrl.u32 %v358, 7
    %v360 = vsub.s32 7, %v359
    %v361 = vrot.slane %v111, %v360
    %v362 = vmul.f32 %v340, %v357
    %v363 = vmul.f32 %v344, %v357
    %v364 = vmul.f32 %v348, %v361
    %v365 = vmul.f32 %v352, %v361
    %v366 = vadd.f32 %v334, %v362
    %v367 = vadd.f32 %v335, %v363
    %v368 = vadd.f32 %v336, %v364
    %v369 = vadd.f32 %v337, %v365
    %370 = vset.pattern.permute.xlu0 8
    %371 = vperm.xlu0 %370, %v51
    %v372 = vpop.permute.xlu0 %371
    %374 = vset.pattern.permute.xlu0 8
    %375 = vperm.xlu0 %374, %v52
    %v376 = vpop.permute.xlu0 %375
    %378 = vset.pattern.permute.xlu0 8
    %379 = vperm.xlu0 %378, %v53
    %v380 = vpop.permute.xlu0 %379
    %382 = vset.pattern.permute.xlu0 8
    %383 = vperm.xlu0 %382, %v54
    %v384 = vpop.permute.xlu0 %383
    %v386 = vlaneseq
    %v387 = vshrl.u32 %v386, 7
    %v388 = vsub.s32 0, %v387
    %v389 = vrot.slane %v110, %v388
    %v390 = vlaneseq
    %v391 = vshrl.u32 %v390, 7
    %v392 = vsub.s32 0, %v391
    %v393 = vrot.slane %v112, %v392
    %v394 = vmul.f32 %v372, %v389
    %v395 = vmul.f32 %v376, %v389
    %v396 = vmul.f32 %v380, %v393
    %v397 = vmul.f32 %v384, %v393
    %v398 = vadd.f32 %v366, %v394
    %v399 = vadd.f32 %v367, %v395
    %v400 = vadd.f32 %v368, %v396
    %v401 = vadd.f32 %v369, %v397
    %402 = vset.pattern.permute.xlu0 9
    %403 = vperm.xlu0 %402, %v51
    %v404 = vpop.permute.xlu0 %403
    %406 = vset.pattern.permute.xlu0 9
    %407 = vperm.xlu0 %406, %v52
    %v408 = vpop.permute.xlu0 %407
    %410 = vset.pattern.permute.xlu0 9
    %411 = vperm.xlu0 %410, %v53
    %v412 = vpop.permute.xlu0 %411
    %414 = vset.pattern.permute.xlu0 9
    %415 = vperm.xlu0 %414, %v54
    %v416 = vpop.permute.xlu0 %415
    %v418 = vlaneseq
    %v419 = vshrl.u32 %v418, 7
    %v420 = vsub.s32 1, %v419
    %v421 = vrot.slane %v110, %v420
    %v422 = vlaneseq
    %v423 = vshrl.u32 %v422, 7
    %v424 = vsub.s32 1, %v423
    %v425 = vrot.slane %v112, %v424
    %v426 = vmul.f32 %v404, %v421
    %v427 = vmul.f32 %v408, %v421
    %v428 = vmul.f32 %v412, %v425
    %v429 = vmul.f32 %v416, %v425
    %v430 = vadd.f32 %v398, %v426
    %v431 = vadd.f32 %v399, %v427
    %v432 = vadd.f32 %v400, %v428
    %v433 = vadd.f32 %v401, %v429
    %434 = vset.pattern.permute.xlu0 10
    %435 = vperm.xlu0 %434, %v51
    %v436 = vpop.permute.xlu0 %435
    %438 = vset.pattern.permute.xlu0 10
    %439 = vperm.xlu0 %438, %v52
    %v440 = vpop.permute.xlu0 %439
    %442 = vset.pattern.permute.xlu0 10
    %443 = vperm.xlu0 %442, %v53
    %v444 = vpop.permute.xlu0 %443
    %446 = vset.pattern.permute.xlu0 10
    %447 = vperm.xlu0 %446, %v54
    %v448 = vpop.permute.xlu0 %447
    %v450 = vlaneseq
    %v451 = vshrl.u32 %v450, 7
    %v452 = vsub.s32 2, %v451
    %v453 = vrot.slane %v110, %v452
    %v454 = vlaneseq
    %v455 = vshrl.u32 %v454, 7
    %v456 = vsub.s32 2, %v455
    %v457 = vrot.slane %v112, %v456
    %v458 = vmul.f32 %v436, %v453
    %v459 = vmul.f32 %v440, %v453
    %v460 = vmul.f32 %v444, %v457
    %v461 = vmul.f32 %v448, %v457
    %v462 = vadd.f32 %v430, %v458
    %v463 = vadd.f32 %v431, %v459
    %v464 = vadd.f32 %v432, %v460
    %v465 = vadd.f32 %v433, %v461
    %466 = vset.pattern.permute.xlu0 11
    %467 = vperm.xlu0 %466, %v51
    %v468 = vpop.permute.xlu0 %467
    %470 = vset.pattern.permute.xlu0 11
    %471 = vperm.xlu0 %470, %v52
    %v472 = vpop.permute.xlu0 %471
    %474 = vset.pattern.permute.xlu0 11
    %475 = vperm.xlu0 %474, %v53
    %v476 = vpop.permute.xlu0 %475
    %478 = vset.pattern.permute.xlu0 11
    %479 = vperm.xlu0 %478, %v54
    %v480 = vpop.permute.xlu0 %479
    %v482 = vlaneseq
    %v483 = vshrl.u32 %v482, 7
    %v484 = vsub.s32 3, %v483
    %v485 = vrot.slane %v110, %v484
    %v486 = vlaneseq
    %v487 = vshrl.u32 %v486, 7
    %v488 = vsub.s32 3, %v487
    %v489 = vrot.slane %v112, %v488
    %v490 = vmul.f32 %v468, %v485
    %v491 = vmul.f32 %v472, %v485
    %v492 = vmul.f32 %v476, %v489
    %v493 = vmul.f32 %v480, %v489
    %v494 = vadd.f32 %v462, %v490
    %v495 = vadd.f32 %v463, %v491
    %v496 = vadd.f32 %v464, %v492
    %v497 = vadd.f32 %v465, %v493
    %498 = vset.pattern.permute.xlu0 12
    %499 = vperm.xlu0 %498, %v51
    %v500 = vpop.permute.xlu0 %499
    %502 = vset.pattern.permute.xlu0 12
    %503 = vperm.xlu0 %502, %v52
    %v504 = vpop.permute.xlu0 %503
    %506 = vset.pattern.permute.xlu0 12
    %507 = vperm.xlu0 %506, %v53
    %v508 = vpop.permute.xlu0 %507
    %510 = vset.pattern.permute.xlu0 12
    %511 = vperm.xlu0 %510, %v54
    %v512 = vpop.permute.xlu0 %511
    %v514 = vlaneseq
    %v515 = vshrl.u32 %v514, 7
    %v516 = vsub.s32 4, %v515
    %v517 = vrot.slane %v110, %v516
    %v518 = vlaneseq
    %v519 = vshrl.u32 %v518, 7
    %v520 = vsub.s32 4, %v519
    %v521 = vrot.slane %v112, %v520
    %v522 = vmul.f32 %v500, %v517
    %v523 = vmul.f32 %v504, %v517
    %v524 = vmul.f32 %v508, %v521
    %v525 = vmul.f32 %v512, %v521
    %v526 = vadd.f32 %v494, %v522
    %v527 = vadd.f32 %v495, %v523
    %v528 = vadd.f32 %v496, %v524
    %v529 = vadd.f32 %v497, %v525
    %530 = vset.pattern.permute.xlu0 13
    %531 = vperm.xlu0 %530, %v51
    %v532 = vpop.permute.xlu0 %531
    %534 = vset.pattern.permute.xlu0 13
    %535 = vperm.xlu0 %534, %v52
    %v536 = vpop.permute.xlu0 %535
    %538 = vset.pattern.permute.xlu0 13
    %539 = vperm.xlu0 %538, %v53
    %v540 = vpop.permute.xlu0 %539
    %542 = vset.pattern.permute.xlu0 13
    %543 = vperm.xlu0 %542, %v54
    %v544 = vpop.permute.xlu0 %543
    %v546 = vlaneseq
    %v547 = vshrl.u32 %v546, 7
    %v548 = vsub.s32 5, %v547
    %v549 = vrot.slane %v110, %v548
    %v550 = vlaneseq
    %v551 = vshrl.u32 %v550, 7
    %v552 = vsub.s32 5, %v551
    %v553 = vrot.slane %v112, %v552
    %v554 = vmul.f32 %v532, %v549
    %v555 = vmul.f32 %v536, %v549
    %v556 = vmul.f32 %v540, %v553
    %v557 = vmul.f32 %v544, %v553
    %v558 = vadd.f32 %v526, %v554
    %v559 = vadd.f32 %v527, %v555
    %v560 = vadd.f32 %v528, %v556
    %v561 = vadd.f32 %v529, %v557
    %562 = vset.pattern.permute.xlu0 14
    %563 = vperm.xlu0 %562, %v51
    %v564 = vpop.permute.xlu0 %563
    %566 = vset.pattern.permute.xlu0 14
    %567 = vperm.xlu0 %566, %v52
    %v568 = vpop.permute.xlu0 %567
    %570 = vset.pattern.permute.xlu0 14
    %571 = vperm.xlu0 %570, %v53
    %v572 = vpop.permute.xlu0 %571
    %574 = vset.pattern.permute.xlu0 14
    %575 = vperm.xlu0 %574, %v54
    %v576 = vpop.permute.xlu0 %575
    %v578 = vlaneseq
    %v579 = vshrl.u32 %v578, 7
    %v580 = vsub.s32 6, %v579
    %v581 = vrot.slane %v110, %v580
    %v582 = vlaneseq
    %v583 = vshrl.u32 %v582, 7
    %v584 = vsub.s32 6, %v583
    %v585 = vrot.slane %v112, %v584
    %v586 = vmul.f32 %v564, %v581
    %v587 = vmul.f32 %v568, %v581
    %v588 = vmul.f32 %v572, %v585
    %v589 = vmul.f32 %v576, %v585
    %v590 = vadd.f32 %v558, %v586
    %v591 = vadd.f32 %v559, %v587
    %v592 = vadd.f32 %v560, %v588
    %v593 = vadd.f32 %v561, %v589
    %594 = vset.pattern.permute.xlu0 15
    %595 = vperm.xlu0 %594, %v51
    %v596 = vpop.permute.xlu0 %595
    %598 = vset.pattern.permute.xlu0 15
    %599 = vperm.xlu0 %598, %v52
    %v600 = vpop.permute.xlu0 %599
    %602 = vset.pattern.permute.xlu0 15
    %603 = vperm.xlu0 %602, %v53
    %v604 = vpop.permute.xlu0 %603
    %606 = vset.pattern.permute.xlu0 15
    %607 = vperm.xlu0 %606, %v54
    %v608 = vpop.permute.xlu0 %607
    %v610 = vlaneseq
    %v611 = vshrl.u32 %v610, 7
    %v612 = vsub.s32 7, %v611
    %v613 = vrot.slane %v110, %v612
    %v614 = vlaneseq
    %v615 = vshrl.u32 %v614, 7
    %v616 = vsub.s32 7, %v615
    %v617 = vrot.slane %v112, %v616
    %v618 = vmul.f32 %v596, %v613
    %v619 = vmul.f32 %v600, %v613
    %v620 = vmul.f32 %v604, %v617
    %v621 = vmul.f32 %v608, %v617
    %v622 = vadd.f32 %v590, %v618
    %v623 = vadd.f32 %v591, %v619
    %v624 = vadd.f32 %v592, %v620
    %v625 = vadd.f32 %v593, %v621
    %630 = vrot.lane.b32.xlu0 %v109, 96
    %v631 = vpop.permute.xlu0 %630
    %632 = vrot.lane.b32.xlu0 %v110, 96
    %v633 = vpop.permute.xlu0 %632
    %634 = vrot.lane.b32.xlu0 %v111, 96
    %v635 = vpop.permute.xlu0 %634
    %636 = vrot.lane.b32.xlu0 %v112, 96
    %v637 = vpop.permute.xlu0 %636
    %v642 = vadd.f32 %v622, %v631
    %v643 = vadd.f32 %v623, %v633
    %v644 = vadd.f32 %v624, %v635
    %v645 = vadd.f32 %v625, %v637
    %v646 = vlaneseq
    %v647 = vshrl.u32 %v646, 7
    %v648 = vsub.s32 0, %v647
    %v649 = vrot.slane %v113, %v648
    %v650 = vadd.f32 %v642, %v649
    %v651 = vadd.f32 %v643, %v649
    %v652 = vadd.f32 %v644, %v649
    %v653 = vadd.f32 %v645, %v649
    %v654 = vld [vmem:[#allocation5 + $0x5] sm:$0x1]
    %v655 = vld [vmem:[#allocation5 + $0x6] sm:$0x1]
    %vm656 = vcmask 261120
    %v657 = vsel %vm656, %v650, 0.0
    %v658 = vsel %vm656, %v651, 0.0
    %v659 = vadd.f32 %v657, %v658
    %v660 = vsel %vm656, %v652, 0.0
    %v661 = vadd.f32 %v659, %v660
    %v662 = vsel %vm656, %v653, 0.0
    %v663 = vadd.f32 %v661, %v662
    %v664 = vrot.slane %v663, 4
    %v665 = vadd.f32 %v663, %v664
    %v666 = vrot.slane %v665, 2
    %v667 = vadd.f32 %v665, %v666
    %v668 = vrot.slane %v667, 1
    %v669 = vadd.f32 %v667, %v668
    %v670 = vrcp.pop 32.0
    %v671 = vmul.f32 %v669, %v670
    %v672 = vsub.f32 %v650, %v671
    %v673 = vsub.f32 %v651, %v671
    %v674 = vsub.f32 %v652, %v671
    %v675 = vsub.f32 %v653, %v671
    %v676 = vmul.f32 %v672, %v672
    %v677 = vmul.f32 %v673, %v673
    %v678 = vmul.f32 %v674, %v674
    %v679 = vmul.f32 %v675, %v675
    %v680 = vsel %vm656, %v676, 0.0
    %v681 = vsel %vm656, %v677, 0.0
    %v682 = vadd.f32 %v680, %v681
    %v683 = vsel %vm656, %v678, 0.0
    %v684 = vadd.f32 %v682, %v683
    %v685 = vsel %vm656, %v679, 0.0
    %v686 = vadd.f32 %v684, %v685
    %v687 = vrot.slane %v686, 4
    %v688 = vadd.f32 %v686, %v687
    %v689 = vrot.slane %v688, 2
    %v690 = vadd.f32 %v688, %v689
    %v691 = vrot.slane %v690, 1
    %v692 = vadd.f32 %v690, %v691
    %v693 = vmul.f32 %v692, %v670
    %v694 = vadd.f32 %v693, 1e-05
    %v695 = vrsqrt.pop %v694
    %v696 = vmul.f32 %v654, %v695
    %v697 = vmul.f32 %v671, %v696
    %v698 = vsub.f32 %v655, %v697
    %v699 = vlaneseq
    %v700 = vshrl.u32 %v699, 7
    %v701 = vsub.s32 0, %v700
    %v702 = vrot.slane %v696, %v701
    %v703 = vmul.f32 %v650, %v702
    %v704 = vmul.f32 %v651, %v702
    %v705 = vmul.f32 %v652, %v702
    %v706 = vmul.f32 %v653, %v702
    %v707 = vlaneseq
    %v708 = vshrl.u32 %v707, 7
    %v709 = vsub.s32 0, %v708
    %v710 = vrot.slane %v698, %v709
    %v711 = vadd.f32 %v703, %v710
    %v712 = vadd.f32 %v704, %v710
    %v713 = vadd.f32 %v705, %v710
    %v714 = vadd.f32 %v706, %v710
    %v715 = vmax.f32 %v711, 0.0
    %v716 = vmax.f32 %v712, 0.0
    %v717 = vmax.f32 %v713, 0.0
    %v718 = vmax.f32 %v714, 0.0
    %v719 = vld [vmem:[#allocation2] sm:$0xf]
    %v720 = vld [vmem:[#allocation2 + $0x4] sm:$0xf]
    %v721 = vld [vmem:[#allocation2 + $0x8] sm:$0xf]
    %v722 = vld [vmem:[#allocation2 + $0xc] sm:$0xf]
    %v723 = vpack.c.bf16 %v716, %v715
    %v724 = vpack.c.bf16 %v718, %v717
    %v729 = vunpack.c.l.b16 %v719
    %v730 = vunpack.c.l.b16 %v720
    %v731 = vunpack.c.l.b16 %v721
    %v732 = vunpack.c.l.b16 %v722
    %v733 = vpack.c.b16 %v730, %v729
    %v734 = vpack.c.b16 %v732, %v731
    %v738 = vsel %vm656, %v723, 0
    %v741 = vsel %vm656, %v724, 0
    %743 = vmatprep.subr.bf16.mxu0 0
    %744 = vmatpush1.bf16.msra.mxu0 %v733
    %745 = vmatprep.subr.bf16.mxu0 0
    %746 = vmatpush1.bf16.msra.mxu0 %v734
    %747 = vmatprep.subr.bf16.mxu0 0
    %748 = vmatpush1.bf16.msra.mxu0 0
    %749 = vmatprep.subr.bf16.mxu0 0
    %750 = vmatpush1.bf16.msra.mxu0 0
    %751 = vmatprep.subr.bf16.mxu0 0
    %752 = vmatpush1.bf16.msra.mxu0 0
    %753 = vmatprep.subr.bf16.mxu0 0
    %754 = vmatpush1.bf16.msra.mxu0 0
    %755 = vmatprep.subr.bf16.mxu0 0
    %756 = vmatpush1.bf16.msra.mxu0 0
    %757 = vmatprep.subr.bf16.mxu0 0
    %758 = vmatpush1.bf16.msra.mxu0 0
    %759 = vmatprep.subr.bf16.mxu0 0
    %760 = vmatpush1.bf16.msra.mxu0 0
    %761 = vmatprep.subr.bf16.mxu0 0
    %762 = vmatpush1.bf16.msra.mxu0 0
    %763 = vmatprep.subr.bf16.mxu0 0
    %764 = vmatpush1.bf16.msra.mxu0 0
    %765 = vmatprep.subr.bf16.mxu0 0
    %766 = vmatpush1.bf16.msra.mxu0 0
    %767 = vmatprep.subr.bf16.mxu0 0
    %768 = vmatpush1.bf16.msra.mxu0 0
    %769 = vmatprep.subr.bf16.mxu0 0
    %770 = vmatpush1.bf16.msra.mxu0 0
    %771 = vmatprep.subr.bf16.mxu0 0
    %772 = vmatpush1.bf16.msra.mxu0 0
    %773 = vmatprep.subr.bf16.mxu0 0
    %774 = vmatpush1.bf16.msra.mxu0 0
    %775 = vmatprep.mubr.bf16.mxu0 0
    %776 = vmatmul.mubr.bf16.gmra.mrb[0].mxu0 %v738
    %v777 = vpop.f32.mrb[0].mxu0
    %v778 = vadd.f32 0.0, %v777
    %v779 = vpop.f32.mrb[0].mxu0
    %v780 = vpop.f32.mrb[0].mxu0
    %v781 = vadd.f32 0.0, %v780
    %v782 = vpop.f32.mrb[0].mxu0
    %783 = vmatprep.mubr.bf16.mxu0 0
    %784 = vmatmul.mubr.bf16.gmra.mrb[0].mxu0 %v741
    %v785 = vpop.f32.mrb[0].mxu0
    %v786 = vadd.f32 0.0, %v785
    %v787 = vpop.f32.mrb[0].mxu0
    %v788 = vpop.f32.mrb[0].mxu0
    %v789 = vadd.f32 0.0, %v788
    %v790 = vpop.f32.mrb[0].mxu0
    %791 = vdwg.mxu0
    %v792 = vld [vmem:[#allocation5 + $0x3] sm:$0x1]
    %v793 = vlaneseq
    %v794 = vshrl.u32 %v793, 7
    %v795 = vsub.s32 0, %v794
    %v796 = vrot.slane %v778, %v795
    %v797 = vlaneseq
    %v798 = vshrl.u32 %v797, 7
    %v799 = vsub.s32 0, %v798
    %v800 = vrot.slane %v786, %v799
    %v801 = vmul.f32 %v117, %v796
    %v802 = vmul.f32 %v122, %v796
    %v803 = vmul.f32 %v127, %v800
    %v804 = vmul.f32 %v132, %v800
    %v805 = vlaneseq
    %v806 = vshrl.u32 %v805, 7
    %v807 = vsub.s32 1, %v806
    %v808 = vrot.slane %v778, %v807
    %v809 = vlaneseq
    %v810 = vshrl.u32 %v809, 7
    %v811 = vsub.s32 1, %v810
    %v812 = vrot.slane %v786, %v811
    %v813 = vmul.f32 %v148, %v808
    %v814 = vmul.f32 %v152, %v808
    %v815 = vmul.f32 %v156, %v812
    %v816 = vmul.f32 %v160, %v812
    %v817 = vadd.f32 %v801, %v813
    %v818 = vadd.f32 %v802, %v814
    %v819 = vadd.f32 %v803, %v815
    %v820 = vadd.f32 %v804, %v816
    %v821 = vlaneseq
    %v822 = vshrl.u32 %v821, 7
    %v823 = vsub.s32 2, %v822
    %v824 = vrot.slane %v778, %v823
    %v825 = vlaneseq
    %v826 = vshrl.u32 %v825, 7
    %v827 = vsub.s32 2, %v826
    %v828 = vrot.slane %v786, %v827
    %v829 = vmul.f32 %v180, %v824
    %v830 = vmul.f32 %v184, %v824
    %v831 = vmul.f32 %v188, %v828
    %v832 = vmul.f32 %v192, %v828
    %v833 = vadd.f32 %v817, %v829
    %v834 = vadd.f32 %v818, %v830
    %v835 = vadd.f32 %v819, %v831
    %v836 = vadd.f32 %v820, %v832
    %v837 = vlaneseq
    %v838 = vshrl.u32 %v837, 7
    %v839 = vsub.s32 3, %v838
    %v840 = vrot.slane %v778, %v839
    %v841 = vlaneseq
    %v842 = vshrl.u32 %v841, 7
    %v843 = vsub.s32 3, %v842
    %v844 = vrot.slane %v786, %v843
    %v845 = vmul.f32 %v212, %v840
    %v846 = vmul.f32 %v216, %v840
    %v847 = vmul.f32 %v220, %v844
    %v848 = vmul.f32 %v224, %v844
    %v849 = vadd.f32 %v833, %v845
    %v850 = vadd.f32 %v834, %v846
    %v851 = vadd.f32 %v835, %v847
    %v852 = vadd.f32 %v836, %v848
    %v853 = vlaneseq
    %v854 = vshrl.u32 %v853, 7
    %v855 = vsub.s32 4, %v854
    %v856 = vrot.slane %v778, %v855
    %v857 = vlaneseq
    %v858 = vshrl.u32 %v857, 7
    %v859 = vsub.s32 4, %v858
    %v860 = vrot.slane %v786, %v859
    %v861 = vmul.f32 %v244, %v856
    %v862 = vmul.f32 %v248, %v856
    %v863 = vmul.f32 %v252, %v860
    %v864 = vmul.f32 %v256, %v860
    %v865 = vadd.f32 %v849, %v861
    %v866 = vadd.f32 %v850, %v862
    %v867 = vadd.f32 %v851, %v863
    %v868 = vadd.f32 %v852, %v864
    %v869 = vlaneseq
    %v870 = vshrl.u32 %v869, 7
    %v871 = vsub.s32 5, %v870
    %v872 = vrot.slane %v778, %v871
    %v873 = vlaneseq
    %v874 = vshrl.u32 %v873, 7
    %v875 = vsub.s32 5, %v874
    %v876 = vrot.slane %v786, %v875
    %v877 = vmul.f32 %v276, %v872
    %v878 = vmul.f32 %v280, %v872
    %v879 = vmul.f32 %v284, %v876
    %v880 = vmul.f32 %v288, %v876
    %v881 = vadd.f32 %v865, %v877
    %v882 = vadd.f32 %v866, %v878
    %v883 = vadd.f32 %v867, %v879
    %v884 = vadd.f32 %v868, %v880
    %v885 = vlaneseq
    %v886 = vshrl.u32 %v885, 7
    %v887 = vsub.s32 6, %v886
    %v888 = vrot.slane %v778, %v887
    %v889 = vlaneseq
    %v890 = vshrl.u32 %v889, 7
    %v891 = vsub.s32 6, %v890
    %v892 = vrot.slane %v786, %v891
    %v893 = vmul.f32 %v308, %v888
    %v894 = vmul.f32 %v312, %v888
    %v895 = vmul.f32 %v316, %v892
    %v896 = vmul.f32 %v320, %v892
    %v897 = vadd.f32 %v881, %v893
    %v898 = vadd.f32 %v882, %v894
    %v899 = vadd.f32 %v883, %v895
    %v900 = vadd.f32 %v884, %v896
    %v901 = vlaneseq
    %v902 = vshrl.u32 %v901, 7
    %v903 = vsub.s32 7, %v902
    %v904 = vrot.slane %v778, %v903
    %v905 = vlaneseq
    %v906 = vshrl.u32 %v905, 7
    %v907 = vsub.s32 7, %v906
    %v908 = vrot.slane %v786, %v907
    %v909 = vmul.f32 %v340, %v904
    %v910 = vmul.f32 %v344, %v904
    %v911 = vmul.f32 %v348, %v908
    %v912 = vmul.f32 %v352, %v908
    %v913 = vadd.f32 %v897, %v909
    %v914 = vadd.f32 %v898, %v910
    %v915 = vadd.f32 %v899, %v911
    %v916 = vadd.f32 %v900, %v912
    %v917 = vlaneseq
    %v918 = vshrl.u32 %v917, 7
    %v919 = vsub.s32 0, %v918
    %v920 = vrot.slane %v781, %v919
    %v921 = vlaneseq
    %v922 = vshrl.u32 %v921, 7
    %v923 = vsub.s32 0, %v922
    %v924 = vrot.slane %v789, %v923
    %v925 = vmul.f32 %v372, %v920
    %v926 = vmul.f32 %v376, %v920
    %v927 = vmul.f32 %v380, %v924
    %v928 = vmul.f32 %v384, %v924
    %v929 = vadd.f32 %v913, %v925
    %v930 = vadd.f32 %v914, %v926
    %v931 = vadd.f32 %v915, %v927
    %v932 = vadd.f32 %v916, %v928
    %v933 = vlaneseq
    %v934 = vshrl.u32 %v933, 7
    %v935 = vsub.s32 1, %v934
    %v936 = vrot.slane %v781, %v935
    %v937 = vlaneseq
    %v938 = vshrl.u32 %v937, 7
    %v939 = vsub.s32 1, %v938
    %v940 = vrot.slane %v789, %v939
    %v941 = vmul.f32 %v404, %v936
    %v942 = vmul.f32 %v408, %v936
    %v943 = vmul.f32 %v412, %v940
    %v944 = vmul.f32 %v416, %v940
    %v945 = vadd.f32 %v929, %v941
    %v946 = vadd.f32 %v930, %v942
    %v947 = vadd.f32 %v931, %v943
    %v948 = vadd.f32 %v932, %v944
    %v949 = vlaneseq
    %v950 = vshrl.u32 %v949, 7
    %v951 = vsub.s32 2, %v950
    %v952 = vrot.slane %v781, %v951
    %v953 = vlaneseq
    %v954 = vshrl.u32 %v953, 7
    %v955 = vsub.s32 2, %v954
    %v956 = vrot.slane %v789, %v955
    %v957 = vmul.f32 %v436, %v952
    %v958 = vmul.f32 %v440, %v952
    %v959 = vmul.f32 %v444, %v956
    %v960 = vmul.f32 %v448, %v956
    %v961 = vadd.f32 %v945, %v957
    %v962 = vadd.f32 %v946, %v958
    %v963 = vadd.f32 %v947, %v959
    %v964 = vadd.f32 %v948, %v960
    %v965 = vlaneseq
    %v966 = vshrl.u32 %v965, 7
    %v967 = vsub.s32 3, %v966
    %v968 = vrot.slane %v781, %v967
    %v969 = vlaneseq
    %v970 = vshrl.u32 %v969, 7
    %v971 = vsub.s32 3, %v970
    %v972 = vrot.slane %v789, %v971
    %v973 = vmul.f32 %v468, %v968
    %v974 = vmul.f32 %v472, %v968
    %v975 = vmul.f32 %v476, %v972
    %v976 = vmul.f32 %v480, %v972
    %v977 = vadd.f32 %v961, %v973
    %v978 = vadd.f32 %v962, %v974
    %v979 = vadd.f32 %v963, %v975
    %v980 = vadd.f32 %v964, %v976
    %v981 = vlaneseq
    %v982 = vshrl.u32 %v981, 7
    %v983 = vsub.s32 4, %v982
    %v984 = vrot.slane %v781, %v983
    %v985 = vlaneseq
    %v986 = vshrl.u32 %v985, 7
    %v987 = vsub.s32 4, %v986
    %v988 = vrot.slane %v789, %v987
    %v989 = vmul.f32 %v500, %v984
    %v990 = vmul.f32 %v504, %v984
    %v991 = vmul.f32 %v508, %v988
    %v992 = vmul.f32 %v512, %v988
    %v993 = vadd.f32 %v977, %v989
    %v994 = vadd.f32 %v978, %v990
    %v995 = vadd.f32 %v979, %v991
    %v996 = vadd.f32 %v980, %v992
    %v997 = vlaneseq
    %v998 = vshrl.u32 %v997, 7
    %v999 = vsub.s32 5, %v998
    %v1000 = vrot.slane %v781, %v999
    %v1001 = vlaneseq
    %v1002 = vshrl.u32 %v1001, 7
    %v1003 = vsub.s32 5, %v1002
    %v1004 = vrot.slane %v789, %v1003
    %v1005 = vmul.f32 %v532, %v1000
    %v1006 = vmul.f32 %v536, %v1000
    %v1007 = vmul.f32 %v540, %v1004
    %v1008 = vmul.f32 %v544, %v1004
    %v1009 = vadd.f32 %v993, %v1005
    %v1010 = vadd.f32 %v994, %v1006
    %v1011 = vadd.f32 %v995, %v1007
    %v1012 = vadd.f32 %v996, %v1008
    %v1013 = vlaneseq
    %v1014 = vshrl.u32 %v1013, 7
    %v1015 = vsub.s32 6, %v1014
    %v1016 = vrot.slane %v781, %v1015
    %v1017 = vlaneseq
    %v1018 = vshrl.u32 %v1017, 7
    %v1019 = vsub.s32 6, %v1018
    %v1020 = vrot.slane %v789, %v1019
    %v1021 = vmul.f32 %v564, %v1016
    %v1022 = vmul.f32 %v568, %v1016
    %v1023 = vmul.f32 %v572, %v1020
    %v1024 = vmul.f32 %v576, %v1020
    %v1025 = vadd.f32 %v1009, %v1021
    %v1026 = vadd.f32 %v1010, %v1022
    %v1027 = vadd.f32 %v1011, %v1023
    %v1028 = vadd.f32 %v1012, %v1024
    %v1029 = vlaneseq
    %v1030 = vshrl.u32 %v1029, 7
    %v1031 = vsub.s32 7, %v1030
    %v1032 = vrot.slane %v781, %v1031
    %v1033 = vlaneseq
    %v1034 = vshrl.u32 %v1033, 7
    %v1035 = vsub.s32 7, %v1034
    %v1036 = vrot.slane %v789, %v1035
    %v1037 = vmul.f32 %v596, %v1032
    %v1038 = vmul.f32 %v600, %v1032
    %v1039 = vmul.f32 %v604, %v1036
    %v1040 = vmul.f32 %v608, %v1036
    %v1041 = vadd.f32 %v1025, %v1037
    %v1042 = vadd.f32 %v1026, %v1038
    %v1043 = vadd.f32 %v1027, %v1039
    %v1044 = vadd.f32 %v1028, %v1040
    %1049 = vrot.lane.b32.xlu0 %v778, 96
    %v1050 = vpop.permute.xlu0 %1049
    %1051 = vrot.lane.b32.xlu0 %v781, 96
    %v1052 = vpop.permute.xlu0 %1051
    %1053 = vrot.lane.b32.xlu0 %v786, 96
    %v1054 = vpop.permute.xlu0 %1053
    %1055 = vrot.lane.b32.xlu0 %v789, 96
    %v1056 = vpop.permute.xlu0 %1055
    %v1061 = vadd.f32 %v1041, %v1050
    %v1062 = vadd.f32 %v1042, %v1052
    %v1063 = vadd.f32 %v1043, %v1054
    %v1064 = vadd.f32 %v1044, %v1056
    %v1065 = vlaneseq
    %v1066 = vshrl.u32 %v1065, 7
    %v1067 = vsub.s32 0, %v1066
    %v1068 = vrot.slane %v792, %v1067
    %v1069 = vadd.f32 %v1061, %v1068
    %v1070 = vadd.f32 %v1062, %v1068
    %v1071 = vadd.f32 %v1063, %v1068
    %v1072 = vadd.f32 %v1064, %v1068
    %v1073 = vld [vmem:[#allocation5 + $0x7] sm:$0x1]
    %v1074 = vld [vmem:[#allocation5 + $0x8] sm:$0x1]
    %v1075 = vsel %vm656, %v1069, 0.0
    %v1076 = vsel %vm656, %v1070, 0.0
    %v1077 = vadd.f32 %v1075, %v1076
    %v1078 = vsel %vm656, %v1071, 0.0
    %v1079 = vadd.f32 %v1077, %v1078
    %v1080 = vsel %vm656, %v1072, 0.0
    %v1081 = vadd.f32 %v1079, %v1080
    %v1082 = vrot.slane %v1081, 4
    %v1083 = vadd.f32 %v1081, %v1082
    %v1084 = vrot.slane %v1083, 2
    %v1085 = vadd.f32 %v1083, %v1084
    %v1086 = vrot.slane %v1085, 1
    %v1087 = vadd.f32 %v1085, %v1086
    %v1088 = vmul.f32 %v1087, %v670
    %v1089 = vsub.f32 %v1069, %v1088
    %v1090 = vsub.f32 %v1070, %v1088
    %v1091 = vsub.f32 %v1071, %v1088
    %v1092 = vsub.f32 %v1072, %v1088
    %v1093 = vmul.f32 %v1089, %v1089
    %v1094 = vmul.f32 %v1090, %v1090
    %v1095 = vmul.f32 %v1091, %v1091
    %v1096 = vmul.f32 %v1092, %v1092
    %v1097 = vsel %vm656, %v1093, 0.0
    %v1098 = vsel %vm656, %v1094, 0.0
    %v1099 = vadd.f32 %v1097, %v1098
    %v1100 = vsel %vm656, %v1095, 0.0
    %v1101 = vadd.f32 %v1099, %v1100
    %v1102 = vsel %vm656, %v1096, 0.0
    %v1103 = vadd.f32 %v1101, %v1102
    %v1104 = vrot.slane %v1103, 4
    %v1105 = vadd.f32 %v1103, %v1104
    %v1106 = vrot.slane %v1105, 2
    %v1107 = vadd.f32 %v1105, %v1106
    %v1108 = vrot.slane %v1107, 1
    %v1109 = vadd.f32 %v1107, %v1108
    %v1110 = vmul.f32 %v1109, %v670
    %v1111 = vadd.f32 %v1110, 1e-05
    %v1112 = vrsqrt.pop %v1111
    %v1113 = vmul.f32 %v1073, %v1112
    %v1114 = vmul.f32 %v1088, %v1113
    %v1115 = vsub.f32 %v1074, %v1114
    %v1116 = vlaneseq
    %v1117 = vshrl.u32 %v1116, 7
    %v1118 = vsub.s32 0, %v1117
    %v1119 = vrot.slane %v1113, %v1118
    %v1120 = vmul.f32 %v1069, %v1119
    %v1121 = vmul.f32 %v1070, %v1119
    %v1122 = vmul.f32 %v1071, %v1119
    %v1123 = vmul.f32 %v1072, %v1119
    %v1124 = vlaneseq
    %v1125 = vshrl.u32 %v1124, 7
    %v1126 = vsub.s32 0, %v1125
    %v1127 = vrot.slane %v1115, %v1126
    %v1128 = vadd.f32 %v1120, %v1127
    %v1129 = vadd.f32 %v1121, %v1127
    %v1130 = vadd.f32 %v1122, %v1127
    %v1131 = vadd.f32 %v1123, %v1127
    %v1132 = vmax.f32 %v1128, 0.0
    %v1133 = vmax.f32 %v1129, 0.0
    %v1134 = vmax.f32 %v1130, 0.0
    %v1135 = vmax.f32 %v1131, 0.0
    %v1136 = vld [vmem:[#allocation2 + $0x10] sm:$0xf]
    %v1137 = vld [vmem:[#allocation2 + $0x14] sm:$0xf]
    %v1138 = vld [vmem:[#allocation2 + $0x18] sm:$0xf]
    %v1139 = vld [vmem:[#allocation2 + $0x1c] sm:$0xf]
    %v1140 = vpack.c.bf16 %v1133, %v1132
    %v1141 = vpack.c.bf16 %v1135, %v1134
    %v1146 = vunpack.c.l.b16 %v1136
    %v1147 = vunpack.c.l.b16 %v1137
    %v1148 = vunpack.c.l.b16 %v1138
    %v1149 = vunpack.c.l.b16 %v1139
    %v1150 = vpack.c.b16 %v1147, %v1146
    %v1151 = vpack.c.b16 %v1149, %v1148
    %v1155 = vsel %vm656, %v1140, 0
    %v1158 = vsel %vm656, %v1141, 0
    %1160 = vmatprep.subr.bf16.mxu0 0
    %1161 = vmatpush1.bf16.msra.mxu0 %v1150
    %1162 = vmatprep.subr.bf16.mxu0 0
    %1163 = vmatpush1.bf16.msra.mxu0 %v1151
    %1164 = vmatprep.subr.bf16.mxu0 0
    %1165 = vmatpush1.bf16.msra.mxu0 0
    %1166 = vmatprep.subr.bf16.mxu0 0
    %1167 = vmatpush1.bf16.msra.mxu0 0
    %1168 = vmatprep.subr.bf16.mxu0 0
    %1169 = vmatpush1.bf16.msra.mxu0 0
    %1170 = vmatprep.subr.bf16.mxu0 0
    %1171 = vmatpush1.bf16.msra.mxu0 0
    %1172 = vmatprep.subr.bf16.mxu0 0
    %1173 = vmatpush1.bf16.msra.mxu0 0
    %1174 = vmatprep.subr.bf16.mxu0 0
    %1175 = vmatpush1.bf16.msra.mxu0 0
    %1176 = vmatprep.subr.bf16.mxu0 0
    %1177 = vmatpush1.bf16.msra.mxu0 0
    %1178 = vmatprep.subr.bf16.mxu0 0
    %1179 = vmatpush1.bf16.msra.mxu0 0
    %1180 = vmatprep.subr.bf16.mxu0 0
    %1181 = vmatpush1.bf16.msra.mxu0 0
    %1182 = vmatprep.subr.bf16.mxu0 0
    %1183 = vmatpush1.bf16.msra.mxu0 0
    %1184 = vmatprep.subr.bf16.mxu0 0
    %1185 = vmatpush1.bf16.msra.mxu0 0
    %1186 = vmatprep.subr.bf16.mxu0 0
    %1187 = vmatpush1.bf16.msra.mxu0 0
    %1188 = vmatprep.subr.bf16.mxu0 0
    %1189 = vmatpush1.bf16.msra.mxu0 0
    %1190 = vmatprep.subr.bf16.mxu0 0
    %1191 = vmatpush1.bf16.msra.mxu0 0
    %1192 = vmatprep.mubr.bf16.mxu0 0
    %1193 = vmatmul.mubr.bf16.gmra.mrb[0].mxu0 %v1155
    %v1194 = vpop.f32.mrb[0].mxu0
    %v1195 = vadd.f32 0.0, %v1194
    %v1196 = vpop.f32.mrb[0].mxu0
    %v1197 = vpop.f32.mrb[0].mxu0
    %v1198 = vadd.f32 0.0, %v1197
    %v1199 = vpop.f32.mrb[0].mxu0
    %1200 = vmatprep.mubr.bf16.mxu0 0
    %1201 = vmatmul.mubr.bf16.gmra.mrb[0].mxu0 %v1158
    %v1202 = vpop.f32.mrb[0].mxu0
    %v1203 = vadd.f32 0.0, %v1202
    %v1204 = vpop.f32.mrb[0].mxu0
    %v1205 = vpop.f32.mrb[0].mxu0
    %v1206 = vadd.f32 0.0, %v1205
    %v1207 = vpop.f32.mrb[0].mxu0
    %1208 = vdwg.mxu0
    %v1209 = vld [vmem:[#allocation5 + $0x4] sm:$0x1]
    %v1210 = vlaneseq
    %v1211 = vshrl.u32 %v1210, 7
    %v1212 = vsub.s32 0, %v1211
    %v1213 = vrot.slane %v1195, %v1212
    %v1214 = vlaneseq
    %v1215 = vshrl.u32 %v1214, 7
    %v1216 = vsub.s32 0, %v1215
    %v1217 = vrot.slane %v1203, %v1216
    %v1218 = vmul.f32 %v117, %v1213
    %v1219 = vmul.f32 %v122, %v1213
    %v1220 = vmul.f32 %v127, %v1217
    %v1221 = vmul.f32 %v132, %v1217
    %v1222 = vlaneseq
    %v1223 = vshrl.u32 %v1222, 7
    %v1224 = vsub.s32 1, %v1223
    %v1225 = vrot.slane %v1195, %v1224
    %v1226 = vlaneseq
    %v1227 = vshrl.u32 %v1226, 7
    %v1228 = vsub.s32 1, %v1227
    %v1229 = vrot.slane %v1203, %v1228
    %v1230 = vmul.f32 %v148, %v1225
    %v1231 = vmul.f32 %v152, %v1225
    %v1232 = vmul.f32 %v156, %v1229
    %v1233 = vmul.f32 %v160, %v1229
    %v1234 = vadd.f32 %v1218, %v1230
    %v1235 = vadd.f32 %v1219, %v1231
    %v1236 = vadd.f32 %v1220, %v1232
    %v1237 = vadd.f32 %v1221, %v1233
    %v1238 = vlaneseq
    %v1239 = vshrl.u32 %v1238, 7
    %v1240 = vsub.s32 2, %v1239
    %v1241 = vrot.slane %v1195, %v1240
    %v1242 = vlaneseq
    %v1243 = vshrl.u32 %v1242, 7
    %v1244 = vsub.s32 2, %v1243
    %v1245 = vrot.slane %v1203, %v1244
    %v1246 = vmul.f32 %v180, %v1241
    %v1247 = vmul.f32 %v184, %v1241
    %v1248 = vmul.f32 %v188, %v1245
    %v1249 = vmul.f32 %v192, %v1245
    %v1250 = vadd.f32 %v1234, %v1246
    %v1251 = vadd.f32 %v1235, %v1247
    %v1252 = vadd.f32 %v1236, %v1248
    %v1253 = vadd.f32 %v1237, %v1249
    %v1254 = vlaneseq
    %v1255 = vshrl.u32 %v1254, 7
    %v1256 = vsub.s32 3, %v1255
    %v1257 = vrot.slane %v1195, %v1256
    %v1258 = vlaneseq
    %v1259 = vshrl.u32 %v1258, 7
    %v1260 = vsub.s32 3, %v1259
    %v1261 = vrot.slane %v1203, %v1260
    %v1262 = vmul.f32 %v212, %v1257
    %v1263 = vmul.f32 %v216, %v1257
    %v1264 = vmul.f32 %v220, %v1261
    %v1265 = vmul.f32 %v224, %v1261
    %v1266 = vadd.f32 %v1250, %v1262
    %v1267 = vadd.f32 %v1251, %v1263
    %v1268 = vadd.f32 %v1252, %v1264
    %v1269 = vadd.f32 %v1253, %v1265
    %v1270 = vlaneseq
    %v1271 = vshrl.u32 %v1270, 7
    %v1272 = vsub.s32 4, %v1271
    %v1273 = vrot.slane %v1195, %v1272
    %v1274 = vlaneseq
    %v1275 = vshrl.u32 %v1274, 7
    %v1276 = vsub.s32 4, %v1275
    %v1277 = vrot.slane %v1203, %v1276
    %v1278 = vmul.f32 %v244, %v1273
    %v1279 = vmul.f32 %v248, %v1273
    %v1280 = vmul.f32 %v252, %v1277
    %v1281 = vmul.f32 %v256, %v1277
    %v1282 = vadd.f32 %v1266, %v1278
    %v1283 = vadd.f32 %v1267, %v1279
    %v1284 = vadd.f32 %v1268, %v1280
    %v1285 = vadd.f32 %v1269, %v1281
    %v1286 = vlaneseq
    %v1287 = vshrl.u32 %v1286, 7
    %v1288 = vsub.s32 5, %v1287
    %v1289 = vrot.slane %v1195, %v1288
    %v1290 = vlaneseq
    %v1291 = vshrl.u32 %v1290, 7
    %v1292 = vsub.s32 5, %v1291
    %v1293 = vrot.slane %v1203, %v1292
    %v1294 = vmul.f32 %v276, %v1289
    %v1295 = vmul.f32 %v280, %v1289
    %v1296 = vmul.f32 %v284, %v1293
    %v1297 = vmul.f32 %v288, %v1293
    %v1298 = vadd.f32 %v1282, %v1294
    %v1299 = vadd.f32 %v1283, %v1295
    %v1300 = vadd.f32 %v1284, %v1296
    %v1301 = vadd.f32 %v1285, %v1297
    %v1302 = vlaneseq
    %v1303 = vshrl.u32 %v1302, 7
    %v1304 = vsub.s32 6, %v1303
    %v1305 = vrot.slane %v1195, %v1304
    %v1306 = vlaneseq
    %v1307 = vshrl.u32 %v1306, 7
    %v1308 = vsub.s32 6, %v1307
    %v1309 = vrot.slane %v1203, %v1308
    %v1310 = vmul.f32 %v308, %v1305
    %v1311 = vmul.f32 %v312, %v1305
    %v1312 = vmul.f32 %v316, %v1309
    %v1313 = vmul.f32 %v320, %v1309
    %v1314 = vadd.f32 %v1298, %v1310
    %v1315 = vadd.f32 %v1299, %v1311
    %v1316 = vadd.f32 %v1300, %v1312
    %v1317 = vadd.f32 %v1301, %v1313
    %v1318 = vlaneseq
    %v1319 = vshrl.u32 %v1318, 7
    %v1320 = vsub.s32 7, %v1319
    %v1321 = vrot.slane %v1195, %v1320
    %v1322 = vlaneseq
    %v1323 = vshrl.u32 %v1322, 7
    %v1324 = vsub.s32 7, %v1323
    %v1325 = vrot.slane %v1203, %v1324
    %v1326 = vmul.f32 %v340, %v1321
    %v1327 = vmul.f32 %v344, %v1321
    %v1328 = vmul.f32 %v348, %v1325
    %v1329 = vmul.f32 %v352, %v1325
    %v1330 = vadd.f32 %v1314, %v1326
    %v1331 = vadd.f32 %v1315, %v1327
    %v1332 = vadd.f32 %v1316, %v1328
    %v1333 = vadd.f32 %v1317, %v1329
    %v1334 = vlaneseq
    %v1335 = vshrl.u32 %v1334, 7
    %v1336 = vsub.s32 0, %v1335
    %v1337 = vrot.slane %v1198, %v1336
    %v1338 = vlaneseq
    %v1339 = vshrl.u32 %v1338, 7
    %v1340 = vsub.s32 0, %v1339
    %v1341 = vrot.slane %v1206, %v1340
    %v1342 = vmul.f32 %v372, %v1337
    %v1343 = vmul.f32 %v376, %v1337
    %v1344 = vmul.f32 %v380, %v1341
    %v1345 = vmul.f32 %v384, %v1341
    %v1346 = vadd.f32 %v1330, %v1342
    %v1347 = vadd.f32 %v1331, %v1343
    %v1348 = vadd.f32 %v1332, %v1344
    %v1349 = vadd.f32 %v1333, %v1345
    %v1350 = vlaneseq
    %v1351 = vshrl.u32 %v1350, 7
    %v1352 = vsub.s32 1, %v1351
    %v1353 = vrot.slane %v1198, %v1352
    %v1354 = vlaneseq
    %v1355 = vshrl.u32 %v1354, 7
    %v1356 = vsub.s32 1, %v1355
    %v1357 = vrot.slane %v1206, %v1356
    %v1358 = vmul.f32 %v404, %v1353
    %v1359 = vmul.f32 %v408, %v1353
    %v1360 = vmul.f32 %v412, %v1357
    %v1361 = vmul.f32 %v416, %v1357
    %v1362 = vadd.f32 %v1346, %v1358
    %v1363 = vadd.f32 %v1347, %v1359
    %v1364 = vadd.f32 %v1348, %v1360
    %v1365 = vadd.f32 %v1349, %v1361
    %v1366 = vlaneseq
    %v1367 = vshrl.u32 %v1366, 7
    %v1368 = vsub.s32 2, %v1367
    %v1369 = vrot.slane %v1198, %v1368
    %v1370 = vlaneseq
    %v1371 = vshrl.u32 %v1370, 7
    %v1372 = vsub.s32 2, %v1371
    %v1373 = vrot.slane %v1206, %v1372
    %v1374 = vmul.f32 %v436, %v1369
    %v1375 = vmul.f32 %v440, %v1369
    %v1376 = vmul.f32 %v444, %v1373
    %v1377 = vmul.f32 %v448, %v1373
    %v1378 = vadd.f32 %v1362, %v1374
    %v1379 = vadd.f32 %v1363, %v1375
    %v1380 = vadd.f32 %v1364, %v1376
    %v1381 = vadd.f32 %v1365, %v1377
    %v1382 = vlaneseq
    %v1383 = vshrl.u32 %v1382, 7
    %v1384 = vsub.s32 3, %v1383
    %v1385 = vrot.slane %v1198, %v1384
    %v1386 = vlaneseq
    %v1387 = vshrl.u32 %v1386, 7
    %v1388 = vsub.s32 3, %v1387
    %v1389 = vrot.slane %v1206, %v1388
    %v1390 = vmul.f32 %v468, %v1385
    %v1391 = vmul.f32 %v472, %v1385
    %v1392 = vmul.f32 %v476, %v1389
    %v1393 = vmul.f32 %v480, %v1389
    %v1394 = vadd.f32 %v1378, %v1390
    %v1395 = vadd.f32 %v1379, %v1391
    %v1396 = vadd.f32 %v1380, %v1392
    %v1397 = vadd.f32 %v1381, %v1393
    %v1398 = vlaneseq
    %v1399 = vshrl.u32 %v1398, 7
    %v1400 = vsub.s32 4, %v1399
    %v1401 = vrot.slane %v1198, %v1400
    %v1402 = vlaneseq
    %v1403 = vshrl.u32 %v1402, 7
    %v1404 = vsub.s32 4, %v1403
    %v1405 = vrot.slane %v1206, %v1404
    %v1406 = vmul.f32 %v500, %v1401
    %v1407 = vmul.f32 %v504, %v1401
    %v1408 = vmul.f32 %v508, %v1405
    %v1409 = vmul.f32 %v512, %v1405
    %v1410 = vadd.f32 %v1394, %v1406
    %v1411 = vadd.f32 %v1395, %v1407
    %v1412 = vadd.f32 %v1396, %v1408
    %v1413 = vadd.f32 %v1397, %v1409
    %v1414 = vlaneseq
    %v1415 = vshrl.u32 %v1414, 7
    %v1416 = vsub.s32 5, %v1415
    %v1417 = vrot.slane %v1198, %v1416
    %v1418 = vlaneseq
    %v1419 = vshrl.u32 %v1418, 7
    %v1420 = vsub.s32 5, %v1419
    %v1421 = vrot.slane %v1206, %v1420
    %v1422 = vmul.f32 %v532, %v1417
    %v1423 = vmul.f32 %v536, %v1417
    %v1424 = vmul.f32 %v540, %v1421
    %v1425 = vmul.f32 %v544, %v1421
    %v1426 = vadd.f32 %v1410, %v1422
    %v1427 = vadd.f32 %v1411, %v1423
    %v1428 = vadd.f32 %v1412, %v1424
    %v1429 = vadd.f32 %v1413, %v1425
    %v1430 = vlaneseq
    %v1431 = vshrl.u32 %v1430, 7
    %v1432 = vsub.s32 6, %v1431
    %v1433 = vrot.slane %v1198, %v1432
    %v1434 = vlaneseq
    %v1435 = vshrl.u32 %v1434, 7
    %v1436 = vsub.s32 6, %v1435
    %v1437 = vrot.slane %v1206, %v1436
    %v1438 = vmul.f32 %v564, %v1433
    %v1439 = vmul.f32 %v568, %v1433
    %v1440 = vmul.f32 %v572, %v1437
    %v1441 = vmul.f32 %v576, %v1437
    %v1442 = vadd.f32 %v1426, %v1438
    %v1443 = vadd.f32 %v1427, %v1439
    %v1444 = vadd.f32 %v1428, %v1440
    %v1445 = vadd.f32 %v1429, %v1441
    %v1446 = vlaneseq
    %v1447 = vshrl.u32 %v1446, 7
    %v1448 = vsub.s32 7, %v1447
    %v1449 = vrot.slane %v1198, %v1448
    %v1450 = vlaneseq
    %v1451 = vshrl.u32 %v1450, 7
    %v1452 = vsub.s32 7, %v1451
    %v1453 = vrot.slane %v1206, %v1452
    %v1454 = vmul.f32 %v596, %v1449
    %v1455 = vmul.f32 %v600, %v1449
    %v1456 = vmul.f32 %v604, %v1453
    %v1457 = vmul.f32 %v608, %v1453
    %v1458 = vadd.f32 %v1442, %v1454
    %v1459 = vadd.f32 %v1443, %v1455
    %v1460 = vadd.f32 %v1444, %v1456
    %v1461 = vadd.f32 %v1445, %v1457
    %1466 = vrot.lane.b32.xlu0 %v1195, 120
    %v1467 = vpop.permute.xlu0 %1466
    %1468 = vrot.lane.b32.xlu0 %v1198, 120
    %v1469 = vpop.permute.xlu0 %1468
    %1470 = vrot.lane.b32.xlu0 %v1203, 120
    %v1471 = vpop.permute.xlu0 %1470
    %1472 = vrot.lane.b32.xlu0 %v1206, 120
    %v1473 = vpop.permute.xlu0 %1472
    %v1478 = vadd.f32 %v1458, %v1467
    %v1479 = vadd.f32 %v1459, %v1469
    %v1480 = vadd.f32 %v1460, %v1471
    %v1481 = vadd.f32 %v1461, %v1473
    %v1482 = vlaneseq
    %v1483 = vshrl.u32 %v1482, 7
    %v1484 = vsub.s32 0, %v1483
    %v1485 = vrot.slane %v1209, %v1484
    %v1486 = vadd.f32 %v1478, %v1485
    %v1487 = vadd.f32 %v1479, %v1485
    %v1488 = vadd.f32 %v1480, %v1485
    %v1489 = vadd.f32 %v1481, %v1485
    %vm1490 = vcmask 64512
    %v1491 = vsel %vm1490, %v1486, 0.0
    %v1492 = vsel %vm1490, %v1487, 0.0
    %v1493 = vsel %vm1490, %v1488, 0.0
    %v1494 = vsel %vm1490, %v1489, 0.0
    %1495 = vst [vmem:[#allocation7] sm:$0xff] %v1491
    %1496 = vst [vmem:[#allocation7 + $0x8] sm:$0xff] %v1492
    %1497 = vst [vmem:[#allocation7 + $0x10] sm:$0xff] %v1493
    %1498 = vst [vmem:[#allocation7 + $0x18] sm:$0xff] %v1494
    // Predicated region
    $region26: #{tpu_custom_call.1} parent=1 // pred_check
      _
    $region27: #{tpu_custom_call.1} parent=1 // pred_check_branch
      %1500 = sbr.rel (0) target = $region29
    $region28: #{tpu_custom_call.1} parent=1 // pred_region
      %s1502 = ssub.s32 512, 512
      %1503 = vsyncadd [#allocation4], %s1502
      %s1504 = sshll.u32 [#allocation7], 4
      %s1505 = int_to_ptr.vmem [resolvable:$true] %s1504
      %1510 = dma.vmem_to_hbm [thread:$0]  %s1505, 512, %s4, [#allocation4], 128, 128, 8
    $region29: #{tpu_custom_call.1} parent=1 // pred_fallthru
      _
    // Predicated region
    $region30: #{tpu_custom_call.1} parent=1 // pred_check
      _
    $region31: #{tpu_custom_call.1} parent=1 // pred_check_branch
      %1512 = sbr.rel (0) target = $region33
    $region32: #{tpu_custom_call.1} parent=1 // pred_region
      %1513 = dma.done [#allocation4], 512
    $region33: #{tpu_custom_call.1} parent=1 // pred_fallthru
      _
    %1514 = vsyncpa [#allocation3], 1
    %1515 = vsyncpa [#allocation6], 1
    %1516 = vsyncpa [#allocation4], 1

</llo_original>
